<compile_context>
chip_gen: v7x
topology: tpu7x:2x2x1
jax: 0.10.0
libtpu: 0.0.40
codegen_flags: <defaults>
</compile_context>

<pallas_src>
import math

import jax
import jax.numpy as jnp
from jax import lax
from jax.experimental import pallas as pl
from jax.experimental.pallas import tpu as pltpu

IN_FEATURES = 384
OUT_FEATURES = 1536


def linear_gelu_kernel(x_ref, w_ref, b_ref, o_ref):
    # x_ref: (M, K) resident        w_ref: (TN, K) per-step weight slab
    # b_ref: (1, N) resident (full) o_ref: (M, TN) per-step output tile
    tn = o_ref.shape[1]
    j = pl.program_id(0)
    # Bias lives in VMEM across the whole grid (constant block index); slice
    # the 128-aligned chunk for this output tile in-kernel.
    start = pl.multiple_of(j * tn, 128)
    b = b_ref[:, pl.ds(start, tn)]

    x = x_ref[...]
    w = w_ref[...]
    # Contract K of both operands: (M, K) x (TN, K) -> (M, TN).  Weight stays
    # in PyTorch layout; MXU handles the transposed-RHS contraction without a
    # host-side weight.T round-trip.
    y = lax.dot_general(
        x, w,
        dimension_numbers=(((1,), (1,)), ((), ())),
        preferred_element_type=jnp.float32,
    ) + b
    # Exact (erf-based) GELU, matching GELU(approximate='none').
    out = 0.5 * y * (1.0 + lax.erf(y * (1.0 / math.sqrt(2.0))))
    o_ref[...] = out.astype(o_ref.dtype)


def linear_gelu(x, weight, bias, *, tn=384):
    """x: (..., 384), weight: (1536, 384) [PyTorch layout], bias: (1536,)."""
    orig_shape = x.shape
    m = math.prod(orig_shape[:-1])   # 196
    k = orig_shape[-1]               # 384
    n = weight.shape[0]              # 1536
    assert n % tn == 0, (n, tn)
    assert tn % 128 == 0, tn         # lane-dense, unmasked output stores

    x2d = x.reshape(m, k)
    b2d = bias.reshape(1, n)

    itemsize = jnp.dtype(x.dtype).itemsize
    cost = pl.CostEstimate(
        flops=2 * m * k * n,
        # erf lowers to a VPU polynomial (not EUP); nominal value only.
        transcendentals=m * n,
        bytes_accessed=(m * k + n * k + n + m * n) * itemsize,
    )

    out = pl.pallas_call(
        linear_gelu_kernel,
        out_shape=jax.ShapeDtypeStruct((m, n), x.dtype),
        grid_spec=pltpu.PrefetchScalarGridSpec(
            num_scalar_prefetch=0,
            grid=(n // tn,),                               # tile output features
            in_specs=[
                pl.BlockSpec((m, k), lambda j: (0, 0)),    # x resident
                pl.BlockSpec((tn, k), lambda j: (j, 0)),   # weight slab (pipelined)
                pl.BlockSpec((1, n), lambda j: (0, 0)),    # bias resident (no per-step DMA)
            ],
            out_specs=pl.BlockSpec((m, tn), lambda j: (0, j)),
        ),
        compiler_params=pltpu.CompilerParams(
            dimension_semantics=("parallel",)),
        cost_estimate=cost,
    )(x2d, weight, b2d)

    return out.reshape(*orig_shape[:-1], n)


def reference(x, weight, bias):
    y = jnp.einsum("...k,nk->...n", x, weight) + bias
    return 0.5 * y * (1.0 + lax.erf(y / math.sqrt(2.0)))


if __name__ == "__main__":
    key = jax.random.PRNGKey(0)
    kx, kw, kb = jax.random.split(key, 3)

    # Input matching the module: [1, 14, 14, 384]
    x = jax.random.normal(kx, (1, 14, 14, IN_FEATURES), dtype=jnp.float32)

    # Deterministic PyTorch-style Linear init: U(-1/sqrt(fan_in), 1/sqrt(fan_in))
    bound = 1.0 / math.sqrt(IN_FEATURES)
    weight = jax.random.uniform(
        kw, (OUT_FEATURES, IN_FEATURES), jnp.float32, -bound, bound)
    bias = jax.random.uniform(kb, (OUT_FEATURES,), jnp.float32, -bound, bound)

    out = linear_gelu(x, weight, bias)
    out = jax.block_until_ready(out)

    ref = reference(x, weight, bias)
    assert out.shape == (1, 14, 14, OUT_FEATURES), out.shape
    assert jnp.allclose(out, ref, atol=1e-4, rtol=1e-4), "mismatch vs reference"

    print("KERNEL_OK")
</pallas_src>

<mosaic_0001>
module attributes {stable_mosaic.version = 11 : i64} {
  func.func @linear_gelu_kernel(%arg0: i32, %arg1: memref<196x384xf32, #tpu.memory_space<vmem>>, %arg2: memref<384x384xf32, #tpu.memory_space<vmem>>, %arg3: memref<1x1536xf32, #tpu.memory_space<vmem>>, %arg4: memref<196x384xf32, #tpu.memory_space<vmem>>) attributes {dimension_semantics = [#tpu.dimension_semantics<parallel>], iteration_bounds = array<i64: 4>, scalar_prefetch = 0 : i64, scratch_operands = 0 : i64, tpu.core_type = #tpu.core_type<tc>, window_params = [{pipeline_mode = #tpu.pipeline_mode<synchronous>, transform_indices = @transform_0, window_bounds = array<i64: 196, 384>}, {transform_indices = @transform_1, window_bounds = array<i64: 384, 384>}, {pipeline_mode = #tpu.pipeline_mode<synchronous>, transform_indices = @transform_2, window_bounds = array<i64: 1, 1536>}, {transform_indices = @transform_3, window_bounds = array<i64: 196, 384>}]} {
    %c384_i32 = arith.constant 384 : i32
    %0 = arith.muli %arg0, %c384_i32 : i32
    %1 = tpu.assume_multiple %0, 128 : i32
    %c0 = arith.constant 0 : index
    %2 = arith.index_cast %1 : i32 to index
    %3 = vector.load %arg3[%c0, %2] : memref<1x1536xf32, #tpu.memory_space<vmem>>, vector<1x384xf32>
    %c0_0 = arith.constant 0 : index
    %c0_1 = arith.constant 0 : index
    %4 = vector.load %arg1[%c0_0, %c0_1] : memref<196x384xf32, #tpu.memory_space<vmem>>, vector<196x384xf32>
    %c0_2 = arith.constant 0 : index
    %c0_3 = arith.constant 0 : index
    %5 = vector.load %arg2[%c0_2, %c0_3] : memref<384x384xf32, #tpu.memory_space<vmem>>, vector<384x384xf32>
    %cst = arith.constant dense<0.000000e+00> : vector<196x384xf32>
    %6 = tpu.matmul %4, %5, %cst {dimension_numbers = #tpu.dot_dimension_numbers<[1], [1], [0], [0], [0, 0, 1, 0], [], []>} : vector<196x384xf32>, vector<384x384xf32>, vector<196x384xf32> -> vector<196x384xf32>
    %7 = vector.broadcast %3 : vector<1x384xf32> to vector<196x384xf32>
    %8 = arith.addf %6, %7 : vector<196x384xf32>
    %cst_4 = arith.constant 5.000000e-01 : f32
    %9 = vector.broadcast %cst_4 : f32 to vector<196x384xf32>
    %10 = arith.mulf %9, %8 : vector<196x384xf32>
    %cst_5 = arith.constant 0.707106769 : f32
    %11 = vector.broadcast %cst_5 : f32 to vector<196x384xf32>
    %12 = arith.mulf %8, %11 : vector<196x384xf32>
    %13 = math.erf %12 : vector<196x384xf32>
    %cst_6 = arith.constant 1.000000e+00 : f32
    %14 = vector.broadcast %cst_6 : f32 to vector<196x384xf32>
    %15 = arith.addf %14, %13 : vector<196x384xf32>
    %16 = arith.mulf %10, %15 : vector<196x384xf32>
    %c0_7 = arith.constant 0 : index
    %c0_8 = arith.constant 0 : index
    %17 = vector.load %arg4[%c0_7, %c0_8] : memref<196x384xf32, #tpu.memory_space<vmem>>, vector<196x384xf32>
    tpu.vector_store %arg4[%c0_7, %c0_8], %16 {strides = array<i32>} : memref<196x384xf32, #tpu.memory_space<vmem>>, vector<196x384xf32>,
    return
  }
  func.func @transform_0(%arg0: i32) -> (i32, i32) {
    %c0_i32 = arith.constant 0 : i32
    %c0_i32_0 = arith.constant 0 : i32
    %c0_i32_1 = arith.constant 0 : i32
    return %c0_i32, %c0_i32_0 : i32, i32
  }
  func.func @transform_1(%arg0: i32) -> (i32, i32) {
    %c0_i32 = arith.constant 0 : i32
    %c0_i32_0 = arith.constant 0 : i32
    return %arg0, %c0_i32 : i32, i32
  }
  func.func @transform_2(%arg0: i32) -> (i32, i32) {
    %c0_i32 = arith.constant 0 : i32
    %c0_i32_0 = arith.constant 0 : i32
    %c0_i32_1 = arith.constant 0 : i32
    return %c0_i32, %c0_i32_0 : i32, i32
  }
  func.func @transform_3(%arg0: i32) -> (i32, i32) {
    %c0_i32 = arith.constant 0 : i32
    %c0_i32_0 = arith.constant 0 : i32
    return %c0_i32, %arg0 : i32, i32
  }
}

</mosaic_0001>

<llo_original>
// kernel: tpu_custom_call.1
$region0: #{tpu_custom_call.1}
  #allocation0 [shape = 'u32[]', space=smem, size = 0x4, offset = 0x4, fixed_abs, tag = 'smem constant byte address 0x4 - core index']
  #allocation1 [shape = 'u32[144,128]{1,0:T(1,128)}', space=vmem, size = 0x12000, scoped, tag = 'internal scratch']
  %s0 = inlined_call_operand.hbm [shape: f32[196,384], index: 0, kind: input, shape index: {}]
  %s1 = inlined_call_operand.hbm [shape: f32[1536,384], index: 1, kind: input, shape index: {}]
  %s2 = inlined_call_operand.hbm [shape: f32[1,1536], index: 2, kind: input, shape index: {}]
  %s3 = inlined_call_operand.hbm [shape: f32[196,1536], index: 3, kind: output, shape index: {}]
  %s4 = sld [smem:[#allocation0]]
  $region57: #{tpu_custom_call.1} parent=0
    _
  %s6 = ssub.s32 1, %s4
  %s7 = scalar_select 0, %s6, %s4
  $region1: #{tpu_custom_call.1} parent=0
    #allocation2 [shape = 'u8[307200]{0}', space=vmem, size = 0x4b000, scoped, tag = 'input window, operand 0, single buffered']
    #allocation3 [shape = 's32[2]{0}', space=sflag, size = 0x8, scoped, tag = 'scoped memory for tpu_custom_call.1']
    #allocation4 [shape = 's32[2]{0}', space=sflag, size = 0x8, scoped, tag = 'scoped memory for tpu_custom_call.1']
    #allocation5 [shape = 'u8[1179648]{0}', space=vmem, size = 0x120000, scoped, tag = 'input window, operand 1']
    #allocation6 [shape = 's32[2]{0}', space=sflag, size = 0x8, scoped, tag = 'scoped memory for tpu_custom_call.1']
    #allocation7 [shape = 'u8[6144]{0}', space=vmem, size = 0x1800, scoped, tag = 'input window, operand 2, single buffered']
    #allocation8 [shape = 'u8[614400]{0}', space=vmem, size = 0x96000, scoped, tag = 'output window, operand 0']
    %8 = vsyncpa [#allocation3], 0
    %9 = vsyncpa [#allocation6], 0
    %s10 = scalar_lea.sflag [#allocation6], 1
    %11 = vsyncpa %s10, 0
    %12 = vsyncpa [#allocation4], 0
    %s13 = scalar_lea.sflag [#allocation4], 1
    %14 = vsyncpa %s13, 0
    loop: start=0, step=1, limit=6
    $region2: #{tpu_custom_call.1} parent=1 // loop_pre_header
      _
    $region3: #{tpu_custom_call.1} parent=1 // loop_header
      %s16 = sphi 0, %s20
      %p17 = scmp.ge.s32.totalorder %s16, 6
      %s24 = sphi 0, %s24
      %s26 = sphi 0, %s24
      %s27 = sphi 0, %s26
      %s41 = sphi 0, %s27
      %s47 = sphi 0, %s49
      %s50 = sphi 0, %s47
      %s51 = sphi 0, %s50
      %s67 = sphi 0, %s51
      %s71 = sphi 0, %s71
      %s73 = sphi 0, %s71
      %s74 = sphi 0, %s73
      %s88 = sphi 0, %s74
      %s94 = sphi 0, %s96
      %s97 = sphi 0, %s94
      %s98 = sphi 0, %s97
      %s114 = sphi 0, %s98
    $region4: #{tpu_custom_call.1} parent=1 // loop_header_branch
      %19 = sbr.rel (%p17) target = $region8
    $region5: #{tpu_custom_call.1} parent=1 // loop_body
      %s21 = ssub.s32 %s16, 1
      %s22 = ssub.s32 %s16, 2
      %s23 = sadd.s32 %s16, 1
      %s25 = sadd.s32 %s24, 1
      %p28 = scmp.eq.s32.totalorder %s16, 3
      %p29 = scmp.ne.s32.totalorder %s24, %s26
      %p30 = scmp.eq.s32.totalorder %s16, 0
      %p31 = por %p29, %p30
      %p32 = scmp.ne.s32.totalorder %s24, %s26
      %p33 = scmp.eq.s32.totalorder %s21, 3
      %p34 = por %p32, %p33
      %p35 = scmp.ne.s32.totalorder %s26, %s27
      %p36 = scmp.eq.s32.totalorder %s21, 0
      %p37 = por %p35, %p36
      %p38 = scmp.ne.s32.totalorder %s26, %s27
      %p39 = scmp.eq.s32.totalorder %s22, 3
      %p40 = por %p38, %p39
      %p42 = scmp.ne.s32.totalorder %s27, %s41
      %p43 = scmp.eq.s32.totalorder %s22, 0
      %p44 = por %p42, %p43
      %s45 = ssub.s32 %s16, %s23
      %p46 = scmp.eq.s32.totalorder %s45, 0
      %s48 = sadd.s32 %s47, 1
      %s49 = scalar_select %p46, %s47, %s48
      %p52 = pneg %p46
      %p53 = scmp.eq.s32.totalorder %s16, 3
      %p54 = por %p52, %p53
      %p55 = scmp.ne.s32.totalorder %s47, %s50
      %p56 = scmp.eq.s32.totalorder %s16, 0
      %p57 = por %p55, %p56
      %p58 = scmp.ne.s32.totalorder %s47, %s50
      %p59 = scmp.eq.s32.totalorder %s21, 3
      %p60 = por %p58, %p59
      %p61 = scmp.ne.s32.totalorder %s50, %s51
      %p62 = scmp.eq.s32.totalorder %s21, 0
      %p63 = por %p61, %p62
      %p64 = scmp.ne.s32.totalorder %s50, %s51
      %p65 = scmp.eq.s32.totalorder %s22, 3
      %p66 = por %p64, %p65
      %p68 = scmp.ne.s32.totalorder %s51, %s67
      %p69 = scmp.eq.s32.totalorder %s22, 0
      %p70 = por %p68, %p69
      %s72 = sadd.s32 %s71, 1
      %p75 = scmp.eq.s32.totalorder %s16, 3
      %p76 = scmp.ne.s32.totalorder %s71, %s73
      %p77 = scmp.eq.s32.totalorder %s16, 0
      %p78 = por %p76, %p77
      %p79 = scmp.ne.s32.totalorder %s71, %s73
      %p80 = scmp.eq.s32.totalorder %s21, 3
      %p81 = por %p79, %p80
      %p82 = scmp.ne.s32.totalorder %s73, %s74
      %p83 = scmp.eq.s32.totalorder %s21, 0
      %p84 = por %p82, %p83
      %p85 = scmp.ne.s32.totalorder %s73, %s74
      %p86 = scmp.eq.s32.totalorder %s22, 3
      %p87 = por %p85, %p86
      %p89 = scmp.ne.s32.totalorder %s74, %s88
      %p90 = scmp.eq.s32.totalorder %s22, 0
      %p91 = por %p89, %p90
      %s92 = ssub.s32 %s16, %s23
      %p93 = scmp.eq.s32.totalorder %s92, 0
      %s95 = sadd.s32 %s94, 1
      %s96 = scalar_select %p93, %s94, %s95
      %p99 = pneg %p93
      %p100 = scmp.eq.s32.totalorder %s16, 3
      %p101 = por %p99, %p100
      %p102 = scmp.ne.s32.totalorder %s94, %s97
      %p103 = scmp.eq.s32.totalorder %s16, 0
      %p104 = por %p102, %p103
      %p105 = scmp.ne.s32.totalorder %s94, %s97
      %p106 = scmp.eq.s32.totalorder %s21, 3
      %p107 = por %p105, %p106
      %p108 = scmp.ne.s32.totalorder %s97, %s98
      %p109 = scmp.eq.s32.totalorder %s21, 0
      %p110 = por %p108, %p109
      %p111 = scmp.ne.s32.totalorder %s97, %s98
      %p112 = scmp.eq.s32.totalorder %s22, 3
      %p113 = por %p111, %p112
      %p115 = scmp.ne.s32.totalorder %s98, %s114
      %p116 = scmp.eq.s32.totalorder %s22, 0
      %p117 = por %p115, %p116
      %p118 = scmp.le.s32.totalorder 1, %s16
      %p119 = scmp.lt.s32.totalorder %s16, 5
      %p120 = pnand %p118, %p119
      %p121 = pneg %p120
      // Predicated region
      $region9: #{tpu_custom_call.1} parent=5 // pred_check
        _
      $region10: #{tpu_custom_call.1} parent=5 // pred_check_branch
        %123 = sbr.rel (%p120) target = $region12
      $region11: #{tpu_custom_call.1} parent=5 // pred_region
        %s124 = ssub.s32 %s16, 1
        // Predicated region
        $region13: #{tpu_custom_call.1} parent=11 // pred_check
          %p125 = pneg %p37
        $region14: #{tpu_custom_call.1} parent=11 // pred_check_branch
          %127 = sbr.rel (%p125) target = $region16
        $region15: #{tpu_custom_call.1} parent=11 // pred_region
          %s129 = ssub.s32 9600, 9600
          %130 = vsyncadd [#allocation3], %s129
          %s131 = sshll.u32 [#allocation2], 4
          %s132 = int_to_ptr.vmem [resolvable:$true] %s131
          %137 = dma.hbm_to_vmem [thread:$0]  %s0, 9600, %s132, [#allocation3], 384, 384, 24
        $region16: #{tpu_custom_call.1} parent=11 // pred_fallthru
          _
        // Predicated region
        $region17: #{tpu_custom_call.1} parent=11 // pred_check
          %p138 = pneg %p84
        $region18: #{tpu_custom_call.1} parent=11 // pred_check_branch
          %140 = sbr.rel (%p138) target = $region20
        $region19: #{tpu_custom_call.1} parent=11 // pred_region
          %s142 = ssub.s32 192, 192
          %143 = vsyncadd [#allocation6], %s142
          %s145 = sshll.u32 [#allocation7], 4
          %s146 = int_to_ptr.vmem [resolvable:$true] %s145
          %148 = dma.hbm_to_vmem [thread:$0]  %s2, 192, %s146, [#allocation6]
        $region20: #{tpu_custom_call.1} parent=11 // pred_fallthru
          _
      $region12: #{tpu_custom_call.1} parent=5 // pred_fallthru
        _
      %p149 = scmp.lt.s32.totalorder %s16, 4
      // Predicated region
      $region21: #{tpu_custom_call.1} parent=5 // pred_check
        %p150 = pneg %p149
      $region22: #{tpu_custom_call.1} parent=5 // pred_check_branch
        %152 = sbr.rel (%p150) target = $region24
      $region23: #{tpu_custom_call.1} parent=5 // pred_region
        // Predicated region
        $region25: #{tpu_custom_call.1} parent=23 // pred_check
          %p153 = pneg %p57
        $region26: #{tpu_custom_call.1} parent=23 // pred_check_branch
          %155 = sbr.rel (%p153) target = $region28
        $region27: #{tpu_custom_call.1} parent=23 // pred_region
          %s156 = sand.u32 %s16, 1
          %s157 = scalar_lea.sflag [#allocation6], %s156
          %s158 = sand.u32 %s47, 1
          %s159 = smul.addr %s158, 1152
          %s160 = scalar_lea.vmem [#allocation5], %s159
          %s161 = smul.u32 48, %s16
          %s163 = ssub.s32 18432, 18432
          %164 = vsyncadd %s157, %s163
          %s165 = smul.addr %s161, 3
          %s166 = smul.addr %s165, 128
          %s167 = scalar_lea.hbm %s1, %s166
          %s168 = sshll.u32 %s160, 4
          %s169 = int_to_ptr.vmem [resolvable:$true] %s168
          %174 = dma.hbm_to_vmem [thread:$0]  %s167, 18432, %s169, %s157, 384, 384, 24
        $region28: #{tpu_custom_call.1} parent=23 // pred_fallthru
          _
      $region24: #{tpu_custom_call.1} parent=5 // pred_fallthru
        _
      %p175 = scmp.le.s32.totalorder 1, %s16
      %p176 = scmp.lt.s32.totalorder %s16, 5
      %p177 = pnand %p175, %p176
      %p178 = pneg %p177
      // Predicated region
      $region29: #{tpu_custom_call.1} parent=5 // pred_check
        _
      $region30: #{tpu_custom_call.1} parent=5 // pred_check_branch
        %180 = sbr.rel (%p177) target = $region32
      $region31: #{tpu_custom_call.1} parent=5 // pred_region
        %s181 = ssub.s32 %s16, 1
        // Predicated region
        $region33: #{tpu_custom_call.1} parent=31 // pred_check
          %p182 = pneg %p37
        $region34: #{tpu_custom_call.1} parent=31 // pred_check_branch
          %184 = sbr.rel (%p182) target = $region36
        $region35: #{tpu_custom_call.1} parent=31 // pred_region
          %185 = dma.done [#allocation3], 9600
        $region36: #{tpu_custom_call.1} parent=31 // pred_fallthru
          _
        %s186 = sand.u32 %s21, 1
        %s187 = scalar_lea.sflag [#allocation6], %s186
        %s188 = sand.u32 %s50, 1
        %s189 = smul.addr %s188, 1152
        %s190 = scalar_lea.vmem [#allocation5], %s189
        // Predicated region
        $region37: #{tpu_custom_call.1} parent=31 // pred_check
          %p191 = pneg %p63
        $region38: #{tpu_custom_call.1} parent=31 // pred_check_branch
          %193 = sbr.rel (%p191) target = $region40
        $region39: #{tpu_custom_call.1} parent=31 // pred_region
          %194 = dma.done %s187, 18432
        $region40: #{tpu_custom_call.1} parent=31 // pred_fallthru
          _
        // Predicated region
        $region41: #{tpu_custom_call.1} parent=31 // pred_check
          %p195 = pneg %p84
        $region42: #{tpu_custom_call.1} parent=31 // pred_check_branch
          %197 = sbr.rel (%p195) target = $region44
        $region43: #{tpu_custom_call.1} parent=31 // pred_region
          %198 = dma.done [#allocation6], 192
        $region44: #{tpu_custom_call.1} parent=31 // pred_fallthru
          _
        %p199 = pneg %p37
        %p200 = pneg %p34
        %s201 = sand.u32 %s21, 1
        %s202 = scalar_lea.sflag [#allocation6], %s201
        %s203 = sand.u32 %s50, 1
        %s204 = smul.addr %s203, 1152
        %s205 = scalar_lea.vmem [#allocation5], %s204
        %p206 = pneg %p63
        %p207 = pneg %p60
        %p208 = pneg %p84
        %p209 = pneg %p81
        %p210 = pneg %p110
        %p211 = pneg %p107
        %s212 = sand.u32 %s97, 1
        %s213 = scalar_lea.sflag [#allocation4], %s212
        %s214 = sand.u32 %s97, 1
        %s215 = smul.addr %s214, 600
        %s216 = scalar_lea.vmem [#allocation8], %s215
        %s217 = smul.u32 48, %s21
        %s218 = smul.u32 3, %s21
        %s219 = smul.u32 %s21, 384
        %s220 = sshra.s32 %s219, 7
        %s221 = sand.u32 %s219, 127
        %s222 = scalar_lea.vmem [#allocation7], %s220
        %v223 = vld [vmem:[%s222] sm:$0x7]
        %v224 = vld [vmem:[#allocation2] sm:$0xff]
        %v225 = vld [vmem:[#allocation2 + $0x8] sm:$0xff]
        %v226 = vld [vmem:[#allocation2 + $0x10] sm:$0xff]
        %v227 = vld [vmem:[#allocation2 + $0x18] sm:$0xff]
        %v228 = vld [vmem:[#allocation2 + $0x20] sm:$0xff]
        %v229 = vld [vmem:[#allocation2 + $0x28] sm:$0xff]
        %v230 = vld [vmem:[#allocation2 + $0x30] sm:$0xff]
        %v231 = vld [vmem:[#allocation2 + $0x38] sm:$0xff]
        %v232 = vld [vmem:[#allocation2 + $0x40] sm:$0xff]
        %v233 = vld [vmem:[#allocation2 + $0x48] sm:$0xff]
        %v234 = vld [vmem:[#allocation2 + $0x50] sm:$0xff]
        %v235 = vld [vmem:[#allocation2 + $0x58] sm:$0xff]
        %v236 = vld [vmem:[#allocation2 + $0x60] sm:$0xff]
        %v237 = vld [vmem:[#allocation2 + $0x68] sm:$0xff]
        %v238 = vld [vmem:[#allocation2 + $0x70] sm:$0xff]
        %v239 = vld [vmem:[#allocation2 + $0x78] sm:$0xff]
        %v240 = vld [vmem:[#allocation2 + $0x80] sm:$0xff]
        %v241 = vld [vmem:[#allocation2 + $0x88] sm:$0xff]
        %v242 = vld [vmem:[#allocation2 + $0x90] sm:$0xff]
        %v243 = vld [vmem:[#allocation2 + $0x98] sm:$0xff]
        %v244 = vld [vmem:[#allocation2 + $0xa0] sm:$0xff]
        %v245 = vld [vmem:[#allocation2 + $0xa8] sm:$0xff]
        %v246 = vld [vmem:[#allocation2 + $0xb0] sm:$0xff]
        %v247 = vld [vmem:[#allocation2 + $0xb8] sm:$0xff]
        %v248 = vld [vmem:[#allocation2 + $0xc0] sm:$0xff]
        %v249 = vld [vmem:[#allocation2 + $0xc8] sm:$0xff]
        %v250 = vld [vmem:[#allocation2 + $0xd0] sm:$0xff]
        %v251 = vld [vmem:[#allocation2 + $0xd8] sm:$0xff]
        %v252 = vld [vmem:[#allocation2 + $0xe0] sm:$0xff]
        %v253 = vld [vmem:[#allocation2 + $0xe8] sm:$0xff]
        %v254 = vld [vmem:[#allocation2 + $0xf0] sm:$0xff]
        %v255 = vld [vmem:[#allocation2 + $0xf8] sm:$0xff]
        %v256 = vld [vmem:[#allocation2 + $0x100] sm:$0xff]
        %v257 = vld [vmem:[#allocation2 + $0x108] sm:$0xff]
        %v258 = vld [vmem:[#allocation2 + $0x110] sm:$0xff]
        %v259 = vld [vmem:[#allocation2 + $0x118] sm:$0xff]
        %v260 = vld [vmem:[#allocation2 + $0x120] sm:$0xff]
        %v261 = vld [vmem:[#allocation2 + $0x128] sm:$0xff]
        %v262 = vld [vmem:[#allocation2 + $0x130] sm:$0xff]
        %v263 = vld [vmem:[#allocation2 + $0x138] sm:$0xff]
        %v264 = vld [vmem:[#allocation2 + $0x140] sm:$0xff]
        %v265 = vld [vmem:[#allocation2 + $0x148] sm:$0xff]
        %v266 = vld [vmem:[#allocation2 + $0x150] sm:$0xff]
        %v267 = vld [vmem:[#allocation2 + $0x158] sm:$0xff]
        %v268 = vld [vmem:[#allocation2 + $0x160] sm:$0xff]
        %v269 = vld [vmem:[#allocation2 + $0x168] sm:$0xff]
        %v270 = vld [vmem:[#allocation2 + $0x170] sm:$0xff]
        %v271 = vld [vmem:[#allocation2 + $0x178] sm:$0xff]
        %v272 = vld [vmem:[#allocation2 + $0x180] sm:$0xff]
        %v273 = vld [vmem:[#allocation2 + $0x188] sm:$0xff]
        %v274 = vld [vmem:[#allocation2 + $0x190] sm:$0xff]
        %v275 = vld [vmem:[#allocation2 + $0x198] sm:$0xff]
        %v276 = vld [vmem:[#allocation2 + $0x1a0] sm:$0xff]
        %v277 = vld [vmem:[#allocation2 + $0x1a8] sm:$0xff]
        %v278 = vld [vmem:[#allocation2 + $0x1b0] sm:$0xff]
        %v279 = vld [vmem:[#allocation2 + $0x1b8] sm:$0xff]
        %v280 = vld [vmem:[#allocation2 + $0x1c0] sm:$0xff]
        %v281 = vld [vmem:[#allocation2 + $0x1c8] sm:$0xff]
        %v282 = vld [vmem:[#allocation2 + $0x1d0] sm:$0xff]
        %v283 = vld [vmem:[#allocation2 + $0x1d8] sm:$0xff]
        %v284 = vld [vmem:[#allocation2 + $0x1e0] sm:$0xff]
        %v285 = vld [vmem:[#allocation2 + $0x1e8] sm:$0xff]
        %v286 = vld [vmem:[#allocation2 + $0x1f0] sm:$0xff]
        %v287 = vld [vmem:[#allocation2 + $0x1f8] sm:$0xff]
        %v288 = vld [vmem:[#allocation2 + $0x200] sm:$0xff]
        %v289 = vld [vmem:[#allocation2 + $0x208] sm:$0xff]
        %v290 = vld [vmem:[#allocation2 + $0x210] sm:$0xff]
        %v291 = vld [vmem:[#allocation2 + $0x218] sm:$0xff]
        %v292 = vld [vmem:[#allocation2 + $0x220] sm:$0xff]
        %v293 = vld [vmem:[#allocation2 + $0x228] sm:$0xff]
        %v294 = vld [vmem:[#allocation2 + $0x230] sm:$0xff]
        %v295 = vld [vmem:[#allocation2 + $0x238] sm:$0xff]
        %v296 = vld [vmem:[#allocation2 + $0x240] sm:$0xf]
        %v297 = vld [vmem:[#allocation2 + $0x248] sm:$0xf]
        %v298 = vld [vmem:[#allocation2 + $0x250] sm:$0xf]
        %v299 = vld [vmem:[%s190] sm:$0xff]
        %v300 = vld [vmem:[%s190 + $0x8] sm:$0xff]
        %v301 = vld [vmem:[%s190 + $0x10] sm:$0xff]
        %v302 = vld [vmem:[%s190 + $0x18] sm:$0xff]
        %v303 = vld [vmem:[%s190 + $0x20] sm:$0xff]
        %v304 = vld [vmem:[%s190 + $0x28] sm:$0xff]
        %v305 = vld [vmem:[%s190 + $0x30] sm:$0xff]
        %v306 = vld [vmem:[%s190 + $0x38] sm:$0xff]
        %v307 = vld [vmem:[%s190 + $0x40] sm:$0xff]
        %v308 = vld [vmem:[%s190 + $0x48] sm:$0xff]
        %v309 = vld [vmem:[%s190 + $0x50] sm:$0xff]
        %v310 = vld [vmem:[%s190 + $0x58] sm:$0xff]
        %v311 = vld [vmem:[%s190 + $0x60] sm:$0xff]
        %v312 = vld [vmem:[%s190 + $0x68] sm:$0xff]
        %v313 = vld [vmem:[%s190 + $0x70] sm:$0xff]
        %v314 = vld [vmem:[%s190 + $0x78] sm:$0xff]
        %v315 = vld [vmem:[%s190 + $0x80] sm:$0xff]
        %v316 = vld [vmem:[%s190 + $0x88] sm:$0xff]
        %v317 = vld [vmem:[%s190 + $0x90] sm:$0xff]
        %v318 = vld [vmem:[%s190 + $0x98] sm:$0xff]
        %v319 = vld [vmem:[%s190 + $0xa0] sm:$0xff]
        %v320 = vld [vmem:[%s190 + $0xa8] sm:$0xff]
        %v321 = vld [vmem:[%s190 + $0xb0] sm:$0xff]
        %v322 = vld [vmem:[%s190 + $0xb8] sm:$0xff]
        %v323 = vld [vmem:[%s190 + $0xc0] sm:$0xff]
        %v324 = vld [vmem:[%s190 + $0xc8] sm:$0xff]
        %v325 = vld [vmem:[%s190 + $0xd0] sm:$0xff]
        %v326 = vld [vmem:[%s190 + $0xd8] sm:$0xff]
        %v327 = vld [vmem:[%s190 + $0xe0] sm:$0xff]
        %v328 = vld [vmem:[%s190 + $0xe8] sm:$0xff]
        %v329 = vld [vmem:[%s190 + $0xf0] sm:$0xff]
        %v330 = vld [vmem:[%s190 + $0xf8] sm:$0xff]
        %v331 = vld [vmem:[%s190 + $0x100] sm:$0xff]
        %v332 = vld [vmem:[%s190 + $0x108] sm:$0xff]
        %v333 = vld [vmem:[%s190 + $0x110] sm:$0xff]
        %v334 = vld [vmem:[%s190 + $0x118] sm:$0xff]
        %v335 = vld [vmem:[%s190 + $0x120] sm:$0xff]
        %v336 = vld [vmem:[%s190 + $0x128] sm:$0xff]
        %v337 = vld [vmem:[%s190 + $0x130] sm:$0xff]
        %v338 = vld [vmem:[%s190 + $0x138] sm:$0xff]
        %v339 = vld [vmem:[%s190 + $0x140] sm:$0xff]
        %v340 = vld [vmem:[%s190 + $0x148] sm:$0xff]
        %v341 = vld [vmem:[%s190 + $0x150] sm:$0xff]
        %v342 = vld [vmem:[%s190 + $0x158] sm:$0xff]
        %v343 = vld [vmem:[%s190 + $0x160] sm:$0xff]
        %v344 = vld [vmem:[%s190 + $0x168] sm:$0xff]
        %v345 = vld [vmem:[%s190 + $0x170] sm:$0xff]
        %v346 = vld [vmem:[%s190 + $0x178] sm:$0xff]
        %v347 = vld [vmem:[%s190 + $0x180] sm:$0xff]
        %v348 = vld [vmem:[%s190 + $0x188] sm:$0xff]
        %v349 = vld [vmem:[%s190 + $0x190] sm:$0xff]
        %v350 = vld [vmem:[%s190 + $0x198] sm:$0xff]
        %v351 = vld [vmem:[%s190 + $0x1a0] sm:$0xff]
        %v352 = vld [vmem:[%s190 + $0x1a8] sm:$0xff]
        %v353 = vld [vmem:[%s190 + $0x1b0] sm:$0xff]
        %v354 = vld [vmem:[%s190 + $0x1b8] sm:$0xff]
        %v355 = vld [vmem:[%s190 + $0x1c0] sm:$0xff]
        %v356 = vld [vmem:[%s190 + $0x1c8] sm:$0xff]
        %v357 = vld [vmem:[%s190 + $0x1d0] sm:$0xff]
        %v358 = vld [vmem:[%s190 + $0x1d8] sm:$0xff]
        %v359 = vld [vmem:[%s190 + $0x1e0] sm:$0xff]
        %v360 = vld [vmem:[%s190 + $0x1e8] sm:$0xff]
        %v361 = vld [vmem:[%s190 + $0x1f0] sm:$0xff]
        %v362 = vld [vmem:[%s190 + $0x1f8] sm:$0xff]
        %v363 = vld [vmem:[%s190 + $0x200] sm:$0xff]
        %v364 = vld [vmem:[%s190 + $0x208] sm:$0xff]
        %v365 = vld [vmem:[%s190 + $0x210] sm:$0xff]
        %v366 = vld [vmem:[%s190 + $0x218] sm:$0xff]
        %v367 = vld [vmem:[%s190 + $0x220] sm:$0xff]
        %v368 = vld [vmem:[%s190 + $0x228] sm:$0xff]
        %v369 = vld [vmem:[%s190 + $0x230] sm:$0xff]
        %v370 = vld [vmem:[%s190 + $0x238] sm:$0xff]
        %v371 = vld [vmem:[%s190 + $0x240] sm:$0xff]
        %v372 = vld [vmem:[%s190 + $0x248] sm:$0xff]
        %v373 = vld [vmem:[%s190 + $0x250] sm:$0xff]
        %v374 = vld [vmem:[%s190 + $0x258] sm:$0xff]
        %v375 = vld [vmem:[%s190 + $0x260] sm:$0xff]
        %v376 = vld [vmem:[%s190 + $0x268] sm:$0xff]
        %v377 = vld [vmem:[%s190 + $0x270] sm:$0xff]
        %v378 = vld [vmem:[%s190 + $0x278] sm:$0xff]
        %v379 = vld [vmem:[%s190 + $0x280] sm:$0xff]
        %v380 = vld [vmem:[%s190 + $0x288] sm:$0xff]
        %v381 = vld [vmem:[%s190 + $0x290] sm:$0xff]
        %v382 = vld [vmem:[%s190 + $0x298] sm:$0xff]
        %v383 = vld [vmem:[%s190 + $0x2a0] sm:$0xff]
        %v384 = vld [vmem:[%s190 + $0x2a8] sm:$0xff]
        %v385 = vld [vmem:[%s190 + $0x2b0] sm:$0xff]
        %v386 = vld [vmem:[%s190 + $0x2b8] sm:$0xff]
        %v387 = vld [vmem:[%s190 + $0x2c0] sm:$0xff]
        %v388 = vld [vmem:[%s190 + $0x2c8] sm:$0xff]
        %v389 = vld [vmem:[%s190 + $0x2d0] sm:$0xff]
        %v390 = vld [vmem:[%s190 + $0x2d8] sm:$0xff]
        %v391 = vld [vmem:[%s190 + $0x2e0] sm:$0xff]
        %v392 = vld [vmem:[%s190 + $0x2e8] sm:$0xff]
        %v393 = vld [vmem:[%s190 + $0x2f0] sm:$0xff]
        %v394 = vld [vmem:[%s190 + $0x2f8] sm:$0xff]
        %v395 = vld [vmem:[%s190 + $0x300] sm:$0xff]
        %v396 = vld [vmem:[%s190 + $0x308] sm:$0xff]
        %v397 = vld [vmem:[%s190 + $0x310] sm:$0xff]
        %v398 = vld [vmem:[%s190 + $0x318] sm:$0xff]
        %v399 = vld [vmem:[%s190 + $0x320] sm:$0xff]
        %v400 = vld [vmem:[%s190 + $0x328] sm:$0xff]
        %v401 = vld [vmem:[%s190 + $0x330] sm:$0xff]
        %v402 = vld [vmem:[%s190 + $0x338] sm:$0xff]
        %v403 = vld [vmem:[%s190 + $0x340] sm:$0xff]
        %v404 = vld [vmem:[%s190 + $0x348] sm:$0xff]
        %v405 = vld [vmem:[%s190 + $0x350] sm:$0xff]
        %v406 = vld [vmem:[%s190 + $0x358] sm:$0xff]
        %v407 = vld [vmem:[%s190 + $0x360] sm:$0xff]
        %v408 = vld [vmem:[%s190 + $0x368] sm:$0xff]
        %v409 = vld [vmem:[%s190 + $0x370] sm:$0xff]
        %v410 = vld [vmem:[%s190 + $0x378] sm:$0xff]
        %v411 = vld [vmem:[%s190 + $0x380] sm:$0xff]
        %v412 = vld [vmem:[%s190 + $0x388] sm:$0xff]
        %v413 = vld [vmem:[%s190 + $0x390] sm:$0xff]
        %v414 = vld [vmem:[%s190 + $0x398] sm:$0xff]
        %v415 = vld [vmem:[%s190 + $0x3a0] sm:$0xff]
        %v416 = vld [vmem:[%s190 + $0x3a8] sm:$0xff]
        %v417 = vld [vmem:[%s190 + $0x3b0] sm:$0xff]
        %v418 = vld [vmem:[%s190 + $0x3b8] sm:$0xff]
        %v419 = vld [vmem:[%s190 + $0x3c0] sm:$0xff]
        %v420 = vld [vmem:[%s190 + $0x3c8] sm:$0xff]
        %v421 = vld [vmem:[%s190 + $0x3d0] sm:$0xff]
        %v422 = vld [vmem:[%s190 + $0x3d8] sm:$0xff]
        %v423 = vld [vmem:[%s190 + $0x3e0] sm:$0xff]
        %v424 = vld [vmem:[%s190 + $0x3e8] sm:$0xff]
        %v425 = vld [vmem:[%s190 + $0x3f0] sm:$0xff]
        %v426 = vld [vmem:[%s190 + $0x3f8] sm:$0xff]
        %v427 = vld [vmem:[%s190 + $0x400] sm:$0xff]
        %v428 = vld [vmem:[%s190 + $0x408] sm:$0xff]
        %v429 = vld [vmem:[%s190 + $0x410] sm:$0xff]
        %v430 = vld [vmem:[%s190 + $0x418] sm:$0xff]
        %v431 = vld [vmem:[%s190 + $0x420] sm:$0xff]
        %v432 = vld [vmem:[%s190 + $0x428] sm:$0xff]
        %v433 = vld [vmem:[%s190 + $0x430] sm:$0xff]
        %v434 = vld [vmem:[%s190 + $0x438] sm:$0xff]
        %v435 = vld [vmem:[%s190 + $0x440] sm:$0xff]
        %v436 = vld [vmem:[%s190 + $0x448] sm:$0xff]
        %v437 = vld [vmem:[%s190 + $0x450] sm:$0xff]
        %v438 = vld [vmem:[%s190 + $0x458] sm:$0xff]
        %v439 = vld [vmem:[%s190 + $0x460] sm:$0xff]
        %v440 = vld [vmem:[%s190 + $0x468] sm:$0xff]
        %v441 = vld [vmem:[%s190 + $0x470] sm:$0xff]
        %v442 = vld [vmem:[%s190 + $0x478] sm:$0xff]
        %v444 = vlaneseq
        %v445 = vshrl.u32 %v444, 7
        %v446 = vsub.s32 0, %v445
        %v447 = vrot.slane %v223, %v446
        %v448 = vlaneseq
        %v449 = vshrl.u32 %v448, 7
        %v450 = vsub.s32 1, %v449
        %v451 = vrot.slane %v223, %v450
        %v452 = vlaneseq
        %v453 = vshrl.u32 %v452, 7
        %v454 = vsub.s32 2, %v453
        %v455 = vrot.slane %v223, %v454
        %459 = vmatprep.subr.mxu0 %v300
        %460 = vmatpush1.xpose.msra.mxu0 %v299
        %461 = vmatprep.subr.mxu0 %v303
        %462 = vmatpush1.xpose.msra.mxu0 %v302
        %463 = vmatprep.subr.mxu0 %v306
        %464 = vmatpush1.xpose.msra.mxu0 %v305
        %465 = vmatprep.subr.mxu0 %v309
        %466 = vmatpush1.xpose.msra.mxu0 %v308
        %467 = vmatprep.subr.mxu0 %v312
        %468 = vmatpush1.xpose.msra.mxu0 %v311
        %469 = vmatprep.subr.mxu0 %v315
        %470 = vmatpush1.xpose.msra.mxu0 %v314
        %471 = vmatprep.subr.mxu0 %v318
        %472 = vmatpush1.xpose.msra.mxu0 %v317
        %473 = vmatprep.subr.mxu0 %v321
        %474 = vmatpush1.xpose.msra.mxu0 %v320
        %475 = vmatprep.subr.mxu0 %v324
        %476 = vmatpush1.xpose.msra.mxu0 %v323
        %477 = vmatprep.subr.mxu0 %v327
        %478 = vmatpush1.xpose.msra.mxu0 %v326
        %479 = vmatprep.subr.mxu0 %v330
        %480 = vmatpush1.xpose.msra.mxu0 %v329
        %481 = vmatprep.subr.mxu0 %v333
        %482 = vmatpush1.xpose.msra.mxu0 %v332
        %483 = vmatprep.subr.mxu0 %v336
        %484 = vmatpush1.xpose.msra.mxu0 %v335
        %485 = vmatprep.subr.mxu0 %v339
        %486 = vmatpush1.xpose.msra.mxu0 %v338
        %487 = vmatprep.subr.mxu0 %v342
        %488 = vmatpush1.xpose.msra.mxu0 %v341
        %489 = vmatprep.subr.mxu0 %v345
        %490 = vmatpush1.xpose.msra.mxu0 %v344
        %491 = vmatprep.subr.mxu0 %v348
        %492 = vmatpush1.xpose.msra.mxu0 %v347
        %493 = vmatprep.subr.mxu0 %v351
        %494 = vmatpush1.xpose.msra.mxu0 %v350
        %495 = vmatprep.subr.mxu0 %v354
        %496 = vmatpush1.xpose.msra.mxu0 %v353
        %497 = vmatprep.subr.mxu0 %v357
        %498 = vmatpush1.xpose.msra.mxu0 %v356
        %499 = vmatprep.subr.mxu0 %v360
        %500 = vmatpush1.xpose.msra.mxu0 %v359
        %501 = vmatprep.subr.mxu0 %v363
        %502 = vmatpush1.xpose.msra.mxu0 %v362
        %503 = vmatprep.subr.mxu0 %v366
        %504 = vmatpush1.xpose.msra.mxu0 %v365
        %505 = vmatprep.subr.mxu0 %v369
        %506 = vmatpush1.xpose.msra.mxu0 %v368
        %507 = vmatprep.subr.mxu0 %v372
        %508 = vmatpush1.xpose.msra.mxu0 %v371
        %509 = vmatprep.subr.mxu0 %v375
        %510 = vmatpush1.xpose.msra.mxu0 %v374
        %511 = vmatprep.subr.mxu0 %v378
        %512 = vmatpush1.xpose.msra.mxu0 %v377
        %513 = vmatprep.subr.mxu0 %v381
        %514 = vmatpush1.xpose.msra.mxu0 %v380
        %515 = vmatprep.subr.mxu0 %v384
        %516 = vmatpush1.xpose.msra.mxu0 %v383
        %517 = vmatprep.subr.mxu0 %v387
        %518 = vmatpush1.xpose.msra.mxu0 %v386
        %519 = vmatprep.subr.mxu0 %v390
        %520 = vmatpush1.xpose.msra.mxu0 %v389
        %521 = vmatprep.subr.mxu0 %v393
        %522 = vmatpush1.xpose.msra.mxu0 %v392
        %523 = vmatprep.mubr.f32.mxu0 %v225
        %524 = vmatmul.mubr.f32.gmra.mrb[0].mxu0 %v224
        %v525 = vpop.f32.mrb[0].mxu0
        %v526 = vadd.f32 %v447, %v525
        %v527 = vpop.f32.mrb[0].mxu0
        %v528 = vadd.f32 %v451, %v527
        %529 = vmatprep.mubr.f32.mxu0 %v228
        %530 = vmatmul.mubr.f32.gmra.mrb[0].mxu0 %v227
        %v531 = vpop.f32.mrb[0].mxu0
        %v532 = vadd.f32 %v447, %v531
        %v533 = vpop.f32.mrb[0].mxu0
        %v534 = vadd.f32 %v451, %v533
        %535 = vmatprep.mubr.f32.mxu0 %v231
        %536 = vmatmul.mubr.f32.gmra.mrb[0].mxu0 %v230
        %v537 = vpop.f32.mrb[0].mxu0
        %v538 = vadd.f32 %v447, %v537
        %v539 = vpop.f32.mrb[0].mxu0
        %v540 = vadd.f32 %v451, %v539
        %541 = vmatprep.mubr.f32.mxu0 %v234
        %542 = vmatmul.mubr.f32.gmra.mrb[0].mxu0 %v233
        %v543 = vpop.f32.mrb[0].mxu0
        %v544 = vadd.f32 %v447, %v543
        %v545 = vpop.f32.mrb[0].mxu0
        %v546 = vadd.f32 %v451, %v545
        %547 = vmatprep.mubr.f32.mxu0 %v237
        %548 = vmatmul.mubr.f32.gmra.mrb[0].mxu0 %v236
        %v549 = vpop.f32.mrb[0].mxu0
        %v550 = vadd.f32 %v447, %v549
        %v551 = vpop.f32.mrb[0].mxu0
        %v552 = vadd.f32 %v451, %v551
        %553 = vmatprep.mubr.f32.mxu0 %v240
        %554 = vmatmul.mubr.f32.gmra.mrb[0].mxu0 %v239
        %v555 = vpop.f32.mrb[0].mxu0
        %v556 = vadd.f32 %v447, %v555
        %v557 = vpop.f32.mrb[0].mxu0
        %v558 = vadd.f32 %v451, %v557
        %559 = vmatprep.mubr.f32.mxu0 %v243
        %560 = vmatmul.mubr.f32.gmra.mrb[0].mxu0 %v242
        %v561 = vpop.f32.mrb[0].mxu0
        %v562 = vadd.f32 %v447, %v561
        %v563 = vpop.f32.mrb[0].mxu0
        %v564 = vadd.f32 %v451, %v563
        %565 = vmatprep.mubr.f32.mxu0 %v246
        %566 = vmatmul.mubr.f32.gmra.mrb[0].mxu0 %v245
        %v567 = vpop.f32.mrb[0].mxu0
        %v568 = vadd.f32 %v447, %v567
        %v569 = vpop.f32.mrb[0].mxu0
        %v570 = vadd.f32 %v451, %v569
        %571 = vmatprep.mubr.f32.mxu0 %v249
        %572 = vmatmul.mubr.f32.gmra.mrb[0].mxu0 %v248
        %v573 = vpop.f32.mrb[0].mxu0
        %v574 = vadd.f32 %v447, %v573
        %v575 = vpop.f32.mrb[0].mxu0
        %v576 = vadd.f32 %v451, %v575
        %577 = vmatprep.mubr.f32.mxu0 %v252
        %578 = vmatmul.mubr.f32.gmra.mrb[0].mxu0 %v251
        %v579 = vpop.f32.mrb[0].mxu0
        %v580 = vadd.f32 %v447, %v579
        %v581 = vpop.f32.mrb[0].mxu0
        %v582 = vadd.f32 %v451, %v581
        %583 = vmatprep.mubr.f32.mxu0 %v255
        %584 = vmatmul.mubr.f32.gmra.mrb[0].mxu0 %v254
        %v585 = vpop.f32.mrb[0].mxu0
        %v586 = vadd.f32 %v447, %v585
        %v587 = vpop.f32.mrb[0].mxu0
        %v588 = vadd.f32 %v451, %v587
        %589 = vmatprep.mubr.f32.mxu0 %v258
        %590 = vmatmul.mubr.f32.gmra.mrb[0].mxu0 %v257
        %v591 = vpop.f32.mrb[0].mxu0
        %v592 = vadd.f32 %v447, %v591
        %v593 = vpop.f32.mrb[0].mxu0
        %v594 = vadd.f32 %v451, %v593
        %595 = vmatprep.mubr.f32.mxu0 %v261
        %596 = vmatmul.mubr.f32.gmra.mrb[0].mxu0 %v260
        %v597 = vpop.f32.mrb[0].mxu0
        %v598 = vadd.f32 %v447, %v597
        %v599 = vpop.f32.mrb[0].mxu0
        %v600 = vadd.f32 %v451, %v599
        %601 = vmatprep.mubr.f32.mxu0 %v264
        %602 = vmatmul.mubr.f32.gmra.mrb[0].mxu0 %v263
        %v603 = vpop.f32.mrb[0].mxu0
        %v604 = vadd.f32 %v447, %v603
        %v605 = vpop.f32.mrb[0].mxu0
        %v606 = vadd.f32 %v451, %v605
        %607 = vmatprep.mubr.f32.mxu0 %v267
        %608 = vmatmul.mubr.f32.gmra.mrb[0].mxu0 %v266
        %v609 = vpop.f32.mrb[0].mxu0
        %v610 = vadd.f32 %v447, %v609
        %v611 = vpop.f32.mrb[0].mxu0
        %v612 = vadd.f32 %v451, %v611
        %613 = vmatprep.mubr.f32.mxu0 %v270
        %614 = vmatmul.mubr.f32.gmra.mrb[0].mxu0 %v269
        %v615 = vpop.f32.mrb[0].mxu0
        %v616 = vadd.f32 %v447, %v615
        %v617 = vpop.f32.mrb[0].mxu0
        %v618 = vadd.f32 %v451, %v617
        %619 = vmatprep.mubr.f32.mxu0 %v273
        %620 = vmatmul.mubr.f32.gmra.mrb[0].mxu0 %v272
        %v621 = vpop.f32.mrb[0].mxu0
        %v622 = vadd.f32 %v447, %v621
        %v623 = vpop.f32.mrb[0].mxu0
        %v624 = vadd.f32 %v451, %v623
        %625 = vmatprep.mubr.f32.mxu0 %v276
        %626 = vmatmul.mubr.f32.gmra.mrb[0].mxu0 %v275
        %v627 = vpop.f32.mrb[0].mxu0
        %v628 = vadd.f32 %v447, %v627
        %v629 = vpop.f32.mrb[0].mxu0
        %v630 = vadd.f32 %v451, %v629
        %631 = vmatprep.mubr.f32.mxu0 %v279
        %632 = vmatmul.mubr.f32.gmra.mrb[0].mxu0 %v278
        %v633 = vpop.f32.mrb[0].mxu0
        %v634 = vadd.f32 %v447, %v633
        %v635 = vpop.f32.mrb[0].mxu0
        %v636 = vadd.f32 %v451, %v635
        %637 = vmatprep.mubr.f32.mxu0 %v282
        %638 = vmatmul.mubr.f32.gmra.mrb[0].mxu0 %v281
        %v639 = vpop.f32.mrb[0].mxu0
        %v640 = vadd.f32 %v447, %v639
        %v641 = vpop.f32.mrb[0].mxu0
        %v642 = vadd.f32 %v451, %v641
        %643 = vmatprep.mubr.f32.mxu0 %v285
        %644 = vmatmul.mubr.f32.gmra.mrb[0].mxu0 %v284
        %v645 = vpop.f32.mrb[0].mxu0
        %v646 = vadd.f32 %v447, %v645
        %v647 = vpop.f32.mrb[0].mxu0
        %v648 = vadd.f32 %v451, %v647
        %649 = vmatprep.mubr.f32.mxu0 %v288
        %650 = vmatmul.mubr.f32.gmra.mrb[0].mxu0 %v287
        %v651 = vpop.f32.mrb[0].mxu0
        %v652 = vadd.f32 %v447, %v651
        %v653 = vpop.f32.mrb[0].mxu0
        %v654 = vadd.f32 %v451, %v653
        %655 = vmatprep.mubr.f32.mxu0 %v291
        %656 = vmatmul.mubr.f32.gmra.mrb[0].mxu0 %v290
        %v657 = vpop.f32.mrb[0].mxu0
        %v658 = vadd.f32 %v447, %v657
        %v659 = vpop.f32.mrb[0].mxu0
        %v660 = vadd.f32 %v451, %v659
        %661 = vmatprep.mubr.f32.mxu0 %v294
        %662 = vmatmul.mubr.f32.gmra.mrb[0].mxu0 %v293
        %v663 = vpop.f32.mrb[0].mxu0
        %v664 = vadd.f32 %v447, %v663
        %v665 = vpop.f32.mrb[0].mxu0
        %v666 = vadd.f32 %v451, %v665
        %667 = vmatprep.mubr.f32.mxu0 %v297
        %668 = vmatmul.mubr.f32.gmra.mrb[0].mxu0 %v296
        %v669 = vpop.f32.mrb[0].mxu0
        %v670 = vadd.f32 %v447, %v669
        %v671 = vpop.f32.mrb[0].mxu0
        %v672 = vadd.f32 %v451, %v671
        %673 = vdwg.mxu0
        %674 = vmatprep.subr.mxu0 0.0
        %675 = vmatpush1.xpose.msra.mxu0 %v301
        %676 = vmatprep.subr.mxu0 0.0
        %677 = vmatpush1.xpose.msra.mxu0 %v304
        %678 = vmatprep.subr.mxu0 0.0
        %679 = vmatpush1.xpose.msra.mxu0 %v307
        %680 = vmatprep.subr.mxu0 0.0
        %681 = vmatpush1.xpose.msra.mxu0 %v310
        %682 = vmatprep.subr.mxu0 0.0
        %683 = vmatpush1.xpose.msra.mxu0 %v313
        %684 = vmatprep.subr.mxu0 0.0
        %685 = vmatpush1.xpose.msra.mxu0 %v316
        %686 = vmatprep.subr.mxu0 0.0
        %687 = vmatpush1.xpose.msra.mxu0 %v319
        %688 = vmatprep.subr.mxu0 0.0
        %689 = vmatpush1.xpose.msra.mxu0 %v322
        %690 = vmatprep.subr.mxu0 0.0
        %691 = vmatpush1.xpose.msra.mxu0 %v325
        %692 = vmatprep.subr.mxu0 0.0
        %693 = vmatpush1.xpose.msra.mxu0 %v328
        %694 = vmatprep.subr.mxu0 0.0
        %695 = vmatpush1.xpose.msra.mxu0 %v331
        %696 = vmatprep.subr.mxu0 0.0
        %697 = vmatpush1.xpose.msra.mxu0 %v334
        %698 = vmatprep.subr.mxu0 0.0
        %699 = vmatpush1.xpose.msra.mxu0 %v337
        %700 = vmatprep.subr.mxu0 0.0
        %701 = vmatpush1.xpose.msra.mxu0 %v340
        %702 = vmatprep.subr.mxu0 0.0
        %703 = vmatpush1.xpose.msra.mxu0 %v343
        %704 = vmatprep.subr.mxu0 0.0
        %705 = vmatpush1.xpose.msra.mxu0 %v346
        %706 = vmatprep.subr.mxu0 0.0
        %707 = vmatpush1.xpose.msra.mxu0 %v349
        %708 = vmatprep.subr.mxu0 0.0
        %709 = vmatpush1.xpose.msra.mxu0 %v352
        %710 = vmatprep.subr.mxu0 0.0
        %711 = vmatpush1.xpose.msra.mxu0 %v355
        %712 = vmatprep.subr.mxu0 0.0
        %713 = vmatpush1.xpose.msra.mxu0 %v358
        %714 = vmatprep.subr.mxu0 0.0
        %715 = vmatpush1.xpose.msra.mxu0 %v361
        %716 = vmatprep.subr.mxu0 0.0
        %717 = vmatpush1.xpose.msra.mxu0 %v364
        %718 = vmatprep.subr.mxu0 0.0
        %719 = vmatpush1.xpose.msra.mxu0 %v367
        %720 = vmatprep.subr.mxu0 0.0
        %721 = vmatpush1.xpose.msra.mxu0 %v370
        %722 = vmatprep.subr.mxu0 0.0
        %723 = vmatpush1.xpose.msra.mxu0 %v373
        %724 = vmatprep.subr.mxu0 0.0
        %725 = vmatpush1.xpose.msra.mxu0 %v376
        %726 = vmatprep.subr.mxu0 0.0
        %727 = vmatpush1.xpose.msra.mxu0 %v379
        %728 = vmatprep.subr.mxu0 0.0
        %729 = vmatpush1.xpose.msra.mxu0 %v382
        %730 = vmatprep.subr.mxu0 0.0
        %731 = vmatpush1.xpose.msra.mxu0 %v385
        %732 = vmatprep.subr.mxu0 0.0
        %733 = vmatpush1.xpose.msra.mxu0 %v388
        %734 = vmatprep.subr.mxu0 0.0
        %735 = vmatpush1.xpose.msra.mxu0 %v391
        %736 = vmatprep.subr.mxu0 0.0
        %737 = vmatpush1.xpose.msra.mxu0 %v394
        %738 = vmatprep.mubr.f32.mxu0 0.0
        %739 = vmatmul.mubr.f32.gmra.mrb[0].mxu0 %v226
        %v740 = vpop.f32.mrb[0].mxu0
        %v741 = vadd.f32 %v526, %v740
        %v742 = vpop.f32.mrb[0].mxu0
        %v743 = vadd.f32 %v528, %v742
        %744 = vmatprep.mubr.f32.mxu0 0.0
        %745 = vmatmul.mubr.f32.gmra.mrb[0].mxu0 %v229
        %v746 = vpop.f32.mrb[0].mxu0
        %v747 = vadd.f32 %v532, %v746
        %v748 = vpop.f32.mrb[0].mxu0
        %v749 = vadd.f32 %v534, %v748
        %750 = vmatprep.mubr.f32.mxu0 0.0
        %751 = vmatmul.mubr.f32.gmra.mrb[0].mxu0 %v232
        %v752 = vpop.f32.mrb[0].mxu0
        %v753 = vadd.f32 %v538, %v752
        %v754 = vpop.f32.mrb[0].mxu0
        %v755 = vadd.f32 %v540, %v754
        %756 = vmatprep.mubr.f32.mxu0 0.0
        %757 = vmatmul.mubr.f32.gmra.mrb[0].mxu0 %v235
        %v758 = vpop.f32.mrb[0].mxu0
        %v759 = vadd.f32 %v544, %v758
        %v760 = vpop.f32.mrb[0].mxu0
        %v761 = vadd.f32 %v546, %v760
        %762 = vmatprep.mubr.f32.mxu0 0.0
        %763 = vmatmul.mubr.f32.gmra.mrb[0].mxu0 %v238
        %v764 = vpop.f32.mrb[0].mxu0
        %v765 = vadd.f32 %v550, %v764
        %v766 = vpop.f32.mrb[0].mxu0
        %v767 = vadd.f32 %v552, %v766
        %768 = vmatprep.mubr.f32.mxu0 0.0
        %769 = vmatmul.mubr.f32.gmra.mrb[0].mxu0 %v241
        %v770 = vpop.f32.mrb[0].mxu0
        %v771 = vadd.f32 %v556, %v770
        %v772 = vpop.f32.mrb[0].mxu0
        %v773 = vadd.f32 %v558, %v772
        %774 = vmatprep.mubr.f32.mxu0 0.0
        %775 = vmatmul.mubr.f32.gmra.mrb[0].mxu0 %v244
        %v776 = vpop.f32.mrb[0].mxu0
        %v777 = vadd.f32 %v562, %v776
        %v778 = vpop.f32.mrb[0].mxu0
        %v779 = vadd.f32 %v564, %v778
        %780 = vmatprep.mubr.f32.mxu0 0.0
        %781 = vmatmul.mubr.f32.gmra.mrb[0].mxu0 %v247
        %v782 = vpop.f32.mrb[0].mxu0
        %v783 = vadd.f32 %v568, %v782
        %v784 = vpop.f32.mrb[0].mxu0
        %v785 = vadd.f32 %v570, %v784
        %786 = vmatprep.mubr.f32.mxu0 0.0
        %787 = vmatmul.mubr.f32.gmra.mrb[0].mxu0 %v250
        %v788 = vpop.f32.mrb[0].mxu0
        %v789 = vadd.f32 %v574, %v788
        %v790 = vpop.f32.mrb[0].mxu0
        %v791 = vadd.f32 %v576, %v790
        %792 = vmatprep.mubr.f32.mxu0 0.0
        %793 = vmatmul.mubr.f32.gmra.mrb[0].mxu0 %v253
        %v794 = vpop.f32.mrb[0].mxu0
        %v795 = vadd.f32 %v580, %v794
        %v796 = vpop.f32.mrb[0].mxu0
        %v797 = vadd.f32 %v582, %v796
        %798 = vmatprep.mubr.f32.mxu0 0.0
        %799 = vmatmul.mubr.f32.gmra.mrb[0].mxu0 %v256
        %v800 = vpop.f32.mrb[0].mxu0
        %v801 = vadd.f32 %v586, %v800
        %v802 = vpop.f32.mrb[0].mxu0
        %v803 = vadd.f32 %v588, %v802
        %804 = vmatprep.mubr.f32.mxu0 0.0
        %805 = vmatmul.mubr.f32.gmra.mrb[0].mxu0 %v259
        %v806 = vpop.f32.mrb[0].mxu0
        %v807 = vadd.f32 %v592, %v806
        %v808 = vpop.f32.mrb[0].mxu0
        %v809 = vadd.f32 %v594, %v808
        %810 = vmatprep.mubr.f32.mxu0 0.0
        %811 = vmatmul.mubr.f32.gmra.mrb[0].mxu0 %v262
        %v812 = vpop.f32.mrb[0].mxu0
        %v813 = vadd.f32 %v598, %v812
        %v814 = vpop.f32.mrb[0].mxu0
        %v815 = vadd.f32 %v600, %v814
        %816 = vmatprep.mubr.f32.mxu0 0.0
        %817 = vmatmul.mubr.f32.gmra.mrb[0].mxu0 %v265
        %v818 = vpop.f32.mrb[0].mxu0
        %v819 = vadd.f32 %v604, %v818
        %v820 = vpop.f32.mrb[0].mxu0
        %v821 = vadd.f32 %v606, %v820
        %822 = vmatprep.mubr.f32.mxu0 0.0
        %823 = vmatmul.mubr.f32.gmra.mrb[0].mxu0 %v268
        %v824 = vpop.f32.mrb[0].mxu0
        %v825 = vadd.f32 %v610, %v824
        %v826 = vpop.f32.mrb[0].mxu0
        %v827 = vadd.f32 %v612, %v826
        %828 = vmatprep.mubr.f32.mxu0 0.0
        %829 = vmatmul.mubr.f32.gmra.mrb[0].mxu0 %v271
        %v830 = vpop.f32.mrb[0].mxu0
        %v831 = vadd.f32 %v616, %v830
        %v832 = vpop.f32.mrb[0].mxu0
        %v833 = vadd.f32 %v618, %v832
        %834 = vmatprep.mubr.f32.mxu0 0.0
        %835 = vmatmul.mubr.f32.gmra.mrb[0].mxu0 %v274
        %v836 = vpop.f32.mrb[0].mxu0
        %v837 = vadd.f32 %v622, %v836
        %v838 = vpop.f32.mrb[0].mxu0
        %v839 = vadd.f32 %v624, %v838
        %840 = vmatprep.mubr.f32.mxu0 0.0
        %841 = vmatmul.mubr.f32.gmra.mrb[0].mxu0 %v277
        %v842 = vpop.f32.mrb[0].mxu0
        %v843 = vadd.f32 %v628, %v842
        %v844 = vpop.f32.mrb[0].mxu0
        %v845 = vadd.f32 %v630, %v844
        %846 = vmatprep.mubr.f32.mxu0 0.0
        %847 = vmatmul.mubr.f32.gmra.mrb[0].mxu0 %v280
        %v848 = vpop.f32.mrb[0].mxu0
        %v849 = vadd.f32 %v634, %v848
        %v850 = vpop.f32.mrb[0].mxu0
        %v851 = vadd.f32 %v636, %v850
        %852 = vmatprep.mubr.f32.mxu0 0.0
        %853 = vmatmul.mubr.f32.gmra.mrb[0].mxu0 %v283
        %v854 = vpop.f32.mrb[0].mxu0
        %v855 = vadd.f32 %v640, %v854
        %v856 = vpop.f32.mrb[0].mxu0
        %v857 = vadd.f32 %v642, %v856
        %858 = vmatprep.mubr.f32.mxu0 0.0
        %859 = vmatmul.mubr.f32.gmra.mrb[0].mxu0 %v286
        %v860 = vpop.f32.mrb[0].mxu0
        %v861 = vadd.f32 %v646, %v860
        %v862 = vpop.f32.mrb[0].mxu0
        %v863 = vadd.f32 %v648, %v862
        %864 = vmatprep.mubr.f32.mxu0 0.0
        %865 = vmatmul.mubr.f32.gmra.mrb[0].mxu0 %v289
        %v866 = vpop.f32.mrb[0].mxu0
        %v867 = vadd.f32 %v652, %v866
        %v868 = vpop.f32.mrb[0].mxu0
        %v869 = vadd.f32 %v654, %v868
        %870 = vmatprep.mubr.f32.mxu0 0.0
        %871 = vmatmul.mubr.f32.gmra.mrb[0].mxu0 %v292
        %v872 = vpop.f32.mrb[0].mxu0
        %v873 = vadd.f32 %v658, %v872
        %v874 = vpop.f32.mrb[0].mxu0
        %v875 = vadd.f32 %v660, %v874
        %876 = vmatprep.mubr.f32.mxu0 0.0
        %877 = vmatmul.mubr.f32.gmra.mrb[0].mxu0 %v295
        %v878 = vpop.f32.mrb[0].mxu0
        %v879 = vadd.f32 %v664, %v878
        %v880 = vpop.f32.mrb[0].mxu0
        %v881 = vadd.f32 %v666, %v880
        %882 = vmatprep.mubr.f32.mxu0 0.0
        %883 = vmatmul.mubr.f32.gmra.mrb[0].mxu0 %v298
        %v884 = vpop.f32.mrb[0].mxu0
        %v885 = vadd.f32 %v670, %v884
        %v886 = vpop.f32.mrb[0].mxu0
        %v887 = vadd.f32 %v672, %v886
        %888 = vdwg.mxu0
        %889 = vmatprep.subr.mxu0 %v396
        %890 = vmatpush1.xpose.msra.mxu0 %v395
        %891 = vmatprep.subr.mxu0 %v399
        %892 = vmatpush1.xpose.msra.mxu0 %v398
        %893 = vmatprep.subr.mxu0 %v402
        %894 = vmatpush1.xpose.msra.mxu0 %v401
        %895 = vmatprep.subr.mxu0 %v405
        %896 = vmatpush1.xpose.msra.mxu0 %v404
        %897 = vmatprep.subr.mxu0 %v408
        %898 = vmatpush1.xpose.msra.mxu0 %v407
        %899 = vmatprep.subr.mxu0 %v411
        %900 = vmatpush1.xpose.msra.mxu0 %v410
        %901 = vmatprep.subr.mxu0 %v414
        %902 = vmatpush1.xpose.msra.mxu0 %v413
        %903 = vmatprep.subr.mxu0 %v417
        %904 = vmatpush1.xpose.msra.mxu0 %v416
        %905 = vmatprep.subr.mxu0 %v420
        %906 = vmatpush1.xpose.msra.mxu0 %v419
        %907 = vmatprep.subr.mxu0 %v423
        %908 = vmatpush1.xpose.msra.mxu0 %v422
        %909 = vmatprep.subr.mxu0 %v426
        %910 = vmatpush1.xpose.msra.mxu0 %v425
        %911 = vmatprep.subr.mxu0 %v429
        %912 = vmatpush1.xpose.msra.mxu0 %v428
        %913 = vmatprep.subr.mxu0 %v432
        %914 = vmatpush1.xpose.msra.mxu0 %v431
        %915 = vmatprep.subr.mxu0 %v435
        %916 = vmatpush1.xpose.msra.mxu0 %v434
        %917 = vmatprep.subr.mxu0 %v438
        %918 = vmatpush1.xpose.msra.mxu0 %v437
        %919 = vmatprep.subr.mxu0 %v441
        %920 = vmatpush1.xpose.msra.mxu0 %v440
        %921 = vmatprep.subr.mxu0 0.0
        %922 = vmatpush1.xpose.msra.mxu0 0.0
        %923 = vmatprep.subr.mxu0 0.0
        %924 = vmatpush1.xpose.msra.mxu0 0.0
        %925 = vmatprep.subr.mxu0 0.0
        %926 = vmatpush1.xpose.msra.mxu0 0.0
        %927 = vmatprep.subr.mxu0 0.0
        %928 = vmatpush1.xpose.msra.mxu0 0.0
        %929 = vmatprep.subr.mxu0 0.0
        %930 = vmatpush1.xpose.msra.mxu0 0.0
        %931 = vmatprep.subr.mxu0 0.0
        %932 = vmatpush1.xpose.msra.mxu0 0.0
        %933 = vmatprep.subr.mxu0 0.0
        %934 = vmatpush1.xpose.msra.mxu0 0.0
        %935 = vmatprep.subr.mxu0 0.0
        %936 = vmatpush1.xpose.msra.mxu0 0.0
        %937 = vmatprep.subr.mxu0 0.0
        %938 = vmatpush1.xpose.msra.mxu0 0.0
        %939 = vmatprep.subr.mxu0 0.0
        %940 = vmatpush1.xpose.msra.mxu0 0.0
        %941 = vmatprep.subr.mxu0 0.0
        %942 = vmatpush1.xpose.msra.mxu0 0.0
        %943 = vmatprep.subr.mxu0 0.0
        %944 = vmatpush1.xpose.msra.mxu0 0.0
        %945 = vmatprep.subr.mxu0 0.0
        %946 = vmatpush1.xpose.msra.mxu0 0.0
        %947 = vmatprep.subr.mxu0 0.0
        %948 = vmatpush1.xpose.msra.mxu0 0.0
        %949 = vmatprep.subr.mxu0 0.0
        %950 = vmatpush1.xpose.msra.mxu0 0.0
        %951 = vmatprep.subr.mxu0 0.0
        %952 = vmatpush1.xpose.msra.mxu0 0.0
        %953 = vmatprep.mubr.f32.mxu0 %v225
        %954 = vmatmul.mubr.f32.gmra.mrb[0].mxu0 %v224
        %v955 = vpop.f32.mrb[0].mxu0
        %v956 = vadd.f32 %v455, %v955
        %v957 = vpop.f32.mrb[0].mxu0
        %958 = vmatprep.mubr.f32.mxu0 %v228
        %959 = vmatmul.mubr.f32.gmra.mrb[0].mxu0 %v227
        %v960 = vpop.f32.mrb[0].mxu0
        %v961 = vadd.f32 %v455, %v960
        %v962 = vpop.f32.mrb[0].mxu0
        %963 = vmatprep.mubr.f32.mxu0 %v231
        %964 = vmatmul.mubr.f32.gmra.mrb[0].mxu0 %v230
        %v965 = vpop.f32.mrb[0].mxu0
        %v966 = vadd.f32 %v455, %v965
        %v967 = vpop.f32.mrb[0].mxu0
        %968 = vmatprep.mubr.f32.mxu0 %v234
        %969 = vmatmul.mubr.f32.gmra.mrb[0].mxu0 %v233
        %v970 = vpop.f32.mrb[0].mxu0
        %v971 = vadd.f32 %v455, %v970
        %v972 = vpop.f32.mrb[0].mxu0
        %973 = vmatprep.mubr.f32.mxu0 %v237
        %974 = vmatmul.mubr.f32.gmra.mrb[0].mxu0 %v236
        %v975 = vpop.f32.mrb[0].mxu0
        %v976 = vadd.f32 %v455, %v975
        %v977 = vpop.f32.mrb[0].mxu0
        %978 = vmatprep.mubr.f32.mxu0 %v240
        %979 = vmatmul.mubr.f32.gmra.mrb[0].mxu0 %v239
        %v980 = vpop.f32.mrb[0].mxu0
        %v981 = vadd.f32 %v455, %v980
        %v982 = vpop.f32.mrb[0].mxu0
        %983 = vmatprep.mubr.f32.mxu0 %v243
        %984 = vmatmul.mubr.f32.gmra.mrb[0].mxu0 %v242
        %v985 = vpop.f32.mrb[0].mxu0
        %v986 = vadd.f32 %v455, %v985
        %v987 = vpop.f32.mrb[0].mxu0
        %988 = vmatprep.mubr.f32.mxu0 %v246
        %989 = vmatmul.mubr.f32.gmra.mrb[0].mxu0 %v245
        %v990 = vpop.f32.mrb[0].mxu0
        %v991 = vadd.f32 %v455, %v990
        %v992 = vpop.f32.mrb[0].mxu0
        %993 = vmatprep.mubr.f32.mxu0 %v249
        %994 = vmatmul.mubr.f32.gmra.mrb[0].mxu0 %v248
        %v995 = vpop.f32.mrb[0].mxu0
        %v996 = vadd.f32 %v455, %v995
        %v997 = vpop.f32.mrb[0].mxu0
        %998 = vmatprep.mubr.f32.mxu0 %v252
        %999 = vmatmul.mubr.f32.gmra.mrb[0].mxu0 %v251
        %v1000 = vpop.f32.mrb[0].mxu0
        %v1001 = vadd.f32 %v455, %v1000
        %v1002 = vpop.f32.mrb[0].mxu0
        %1003 = vmatprep.mubr.f32.mxu0 %v255
        %1004 = vmatmul.mubr.f32.gmra.mrb[0].mxu0 %v254
        %v1005 = vpop.f32.mrb[0].mxu0
        %v1006 = vadd.f32 %v455, %v1005
        %v1007 = vpop.f32.mrb[0].mxu0
        %1008 = vmatprep.mubr.f32.mxu0 %v258
        %1009 = vmatmul.mubr.f32.gmra.mrb[0].mxu0 %v257
        %v1010 = vpop.f32.mrb[0].mxu0
        %v1011 = vadd.f32 %v455, %v1010
        %v1012 = vpop.f32.mrb[0].mxu0
        %1013 = vmatprep.mubr.f32.mxu0 %v261
        %1014 = vmatmul.mubr.f32.gmra.mrb[0].mxu0 %v260
        %v1015 = vpop.f32.mrb[0].mxu0
        %v1016 = vadd.f32 %v455, %v1015
        %v1017 = vpop.f32.mrb[0].mxu0
        %1018 = vmatprep.mubr.f32.mxu0 %v264
        %1019 = vmatmul.mubr.f32.gmra.mrb[0].mxu0 %v263
        %v1020 = vpop.f32.mrb[0].mxu0
        %v1021 = vadd.f32 %v455, %v1020
        %v1022 = vpop.f32.mrb[0].mxu0
        %1023 = vmatprep.mubr.f32.mxu0 %v267
        %1024 = vmatmul.mubr.f32.gmra.mrb[0].mxu0 %v266
        %v1025 = vpop.f32.mrb[0].mxu0
        %v1026 = vadd.f32 %v455, %v1025
        %v1027 = vpop.f32.mrb[0].mxu0
        %1028 = vmatprep.mubr.f32.mxu0 %v270
        %1029 = vmatmul.mubr.f32.gmra.mrb[0].mxu0 %v269
        %v1030 = vpop.f32.mrb[0].mxu0
        %v1031 = vadd.f32 %v455, %v1030
        %v1032 = vpop.f32.mrb[0].mxu0
        %1033 = vmatprep.mubr.f32.mxu0 %v273
        %1034 = vmatmul.mubr.f32.gmra.mrb[0].mxu0 %v272
        %v1035 = vpop.f32.mrb[0].mxu0
        %v1036 = vadd.f32 %v455, %v1035
        %v1037 = vpop.f32.mrb[0].mxu0
        %1038 = vmatprep.mubr.f32.mxu0 %v276
        %1039 = vmatmul.mubr.f32.gmra.mrb[0].mxu0 %v275
        %v1040 = vpop.f32.mrb[0].mxu0
        %v1041 = vadd.f32 %v455, %v1040
        %v1042 = vpop.f32.mrb[0].mxu0
        %1043 = vmatprep.mubr.f32.mxu0 %v279
        %1044 = vmatmul.mubr.f32.gmra.mrb[0].mxu0 %v278
        %v1045 = vpop.f32.mrb[0].mxu0
        %v1046 = vadd.f32 %v455, %v1045
        %v1047 = vpop.f32.mrb[0].mxu0
        %1048 = vmatprep.mubr.f32.mxu0 %v282
        %1049 = vmatmul.mubr.f32.gmra.mrb[0].mxu0 %v281
        %v1050 = vpop.f32.mrb[0].mxu0
        %v1051 = vadd.f32 %v455, %v1050
        %v1052 = vpop.f32.mrb[0].mxu0
        %1053 = vmatprep.mubr.f32.mxu0 %v285
        %1054 = vmatmul.mubr.f32.gmra.mrb[0].mxu0 %v284
        %v1055 = vpop.f32.mrb[0].mxu0
        %v1056 = vadd.f32 %v455, %v1055
        %v1057 = vpop.f32.mrb[0].mxu0
        %1058 = vmatprep.mubr.f32.mxu0 %v288
        %1059 = vmatmul.mubr.f32.gmra.mrb[0].mxu0 %v287
        %v1060 = vpop.f32.mrb[0].mxu0
        %v1061 = vadd.f32 %v455, %v1060
        %v1062 = vpop.f32.mrb[0].mxu0
        %1063 = vmatprep.mubr.f32.mxu0 %v291
        %1064 = vmatmul.mubr.f32.gmra.mrb[0].mxu0 %v290
        %v1065 = vpop.f32.mrb[0].mxu0
        %v1066 = vadd.f32 %v455, %v1065
        %v1067 = vpop.f32.mrb[0].mxu0
        %1068 = vmatprep.mubr.f32.mxu0 %v294
        %1069 = vmatmul.mubr.f32.gmra.mrb[0].mxu0 %v293
        %v1070 = vpop.f32.mrb[0].mxu0
        %v1071 = vadd.f32 %v455, %v1070
        %v1072 = vpop.f32.mrb[0].mxu0
        %1073 = vmatprep.mubr.f32.mxu0 %v297
        %1074 = vmatmul.mubr.f32.gmra.mrb[0].mxu0 %v296
        %v1075 = vpop.f32.mrb[0].mxu0
        %v1076 = vadd.f32 %v455, %v1075
        %v1077 = vpop.f32.mrb[0].mxu0
        %1078 = vdwg.mxu0
        %1079 = vmatprep.subr.mxu0 0.0
        %1080 = vmatpush1.xpose.msra.mxu0 %v397
        %1081 = vmatprep.subr.mxu0 0.0
        %1082 = vmatpush1.xpose.msra.mxu0 %v400
        %1083 = vmatprep.subr.mxu0 0.0
        %1084 = vmatpush1.xpose.msra.mxu0 %v403
        %1085 = vmatprep.subr.mxu0 0.0
        %1086 = vmatpush1.xpose.msra.mxu0 %v406
        %1087 = vmatprep.subr.mxu0 0.0
        %1088 = vmatpush1.xpose.msra.mxu0 %v409
        %1089 = vmatprep.subr.mxu0 0.0
        %1090 = vmatpush1.xpose.msra.mxu0 %v412
        %1091 = vmatprep.subr.mxu0 0.0
        %1092 = vmatpush1.xpose.msra.mxu0 %v415
        %1093 = vmatprep.subr.mxu0 0.0
        %1094 = vmatpush1.xpose.msra.mxu0 %v418
        %1095 = vmatprep.subr.mxu0 0.0
        %1096 = vmatpush1.xpose.msra.mxu0 %v421
        %1097 = vmatprep.subr.mxu0 0.0
        %1098 = vmatpush1.xpose.msra.mxu0 %v424
        %1099 = vmatprep.subr.mxu0 0.0
        %1100 = vmatpush1.xpose.msra.mxu0 %v427
        %1101 = vmatprep.subr.mxu0 0.0
        %1102 = vmatpush1.xpose.msra.mxu0 %v430
        %1103 = vmatprep.subr.mxu0 0.0
        %1104 = vmatpush1.xpose.msra.mxu0 %v433
        %1105 = vmatprep.subr.mxu0 0.0
        %1106 = vmatpush1.xpose.msra.mxu0 %v436
        %1107 = vmatprep.subr.mxu0 0.0
        %1108 = vmatpush1.xpose.msra.mxu0 %v439
        %1109 = vmatprep.subr.mxu0 0.0
        %1110 = vmatpush1.xpose.msra.mxu0 %v442
        %1111 = vmatprep.subr.mxu0 0.0
        %1112 = vmatpush1.xpose.msra.mxu0 0.0
        %1113 = vmatprep.subr.mxu0 0.0
        %1114 = vmatpush1.xpose.msra.mxu0 0.0
        %1115 = vmatprep.subr.mxu0 0.0
        %1116 = vmatpush1.xpose.msra.mxu0 0.0
        %1117 = vmatprep.subr.mxu0 0.0
        %1118 = vmatpush1.xpose.msra.mxu0 0.0
        %1119 = vmatprep.subr.mxu0 0.0
        %1120 = vmatpush1.xpose.msra.mxu0 0.0
        %1121 = vmatprep.subr.mxu0 0.0
        %1122 = vmatpush1.xpose.msra.mxu0 0.0
        %1123 = vmatprep.subr.mxu0 0.0
        %1124 = vmatpush1.xpose.msra.mxu0 0.0
        %1125 = vmatprep.subr.mxu0 0.0
        %1126 = vmatpush1.xpose.msra.mxu0 0.0
        %1127 = vmatprep.subr.mxu0 0.0
        %1128 = vmatpush1.xpose.msra.mxu0 0.0
        %1129 = vmatprep.subr.mxu0 0.0
        %1130 = vmatpush1.xpose.msra.mxu0 0.0
        %1131 = vmatprep.subr.mxu0 0.0
        %1132 = vmatpush1.xpose.msra.mxu0 0.0
        %1133 = vmatprep.subr.mxu0 0.0
        %1134 = vmatpush1.xpose.msra.mxu0 0.0
        %1135 = vmatprep.subr.mxu0 0.0
        %1136 = vmatpush1.xpose.msra.mxu0 0.0
        %1137 = vmatprep.subr.mxu0 0.0
        %1138 = vmatpush1.xpose.msra.mxu0 0.0
        %1139 = vmatprep.subr.mxu0 0.0
        %1140 = vmatpush1.xpose.msra.mxu0 0.0
        %1141 = vmatprep.subr.mxu0 0.0
        %1142 = vmatpush1.xpose.msra.mxu0 0.0
        %1143 = vmatprep.mubr.f32.mxu0 0.0
        %1144 = vmatmul.mubr.f32.gmra.mrb[0].mxu0 %v226
        %v1145 = vpop.f32.mrb[0].mxu0
        %v1146 = vadd.f32 %v956, %v1145
        %v1147 = vpop.f32.mrb[0].mxu0
        %1148 = vmatprep.mubr.f32.mxu0 0.0
        %1149 = vmatmul.mubr.f32.gmra.mrb[0].mxu0 %v229
        %v1150 = vpop.f32.mrb[0].mxu0
        %v1151 = vadd.f32 %v961, %v1150
        %v1152 = vpop.f32.mrb[0].mxu0
        %1153 = vmatprep.mubr.f32.mxu0 0.0
        %1154 = vmatmul.mubr.f32.gmra.mrb[0].mxu0 %v232
        %v1155 = vpop.f32.mrb[0].mxu0
        %v1156 = vadd.f32 %v966, %v1155
        %v1157 = vpop.f32.mrb[0].mxu0
        %1158 = vmatprep.mubr.f32.mxu0 0.0
        %1159 = vmatmul.mubr.f32.gmra.mrb[0].mxu0 %v235
        %v1160 = vpop.f32.mrb[0].mxu0
        %v1161 = vadd.f32 %v971, %v1160
        %v1162 = vpop.f32.mrb[0].mxu0
        %1163 = vmatprep.mubr.f32.mxu0 0.0
        %1164 = vmatmul.mubr.f32.gmra.mrb[0].mxu0 %v238
        %v1165 = vpop.f32.mrb[0].mxu0
        %v1166 = vadd.f32 %v976, %v1165
        %v1167 = vpop.f32.mrb[0].mxu0
        %1168 = vmatprep.mubr.f32.mxu0 0.0
        %1169 = vmatmul.mubr.f32.gmra.mrb[0].mxu0 %v241
        %v1170 = vpop.f32.mrb[0].mxu0
        %v1171 = vadd.f32 %v981, %v1170
        %v1172 = vpop.f32.mrb[0].mxu0
        %1173 = vmatprep.mubr.f32.mxu0 0.0
        %1174 = vmatmul.mubr.f32.gmra.mrb[0].mxu0 %v244
        %v1175 = vpop.f32.mrb[0].mxu0
        %v1176 = vadd.f32 %v986, %v1175
        %v1177 = vpop.f32.mrb[0].mxu0
        %1178 = vmatprep.mubr.f32.mxu0 0.0
        %1179 = vmatmul.mubr.f32.gmra.mrb[0].mxu0 %v247
        %v1180 = vpop.f32.mrb[0].mxu0
        %v1181 = vadd.f32 %v991, %v1180
        %v1182 = vpop.f32.mrb[0].mxu0
        %1183 = vmatprep.mubr.f32.mxu0 0.0
        %1184 = vmatmul.mubr.f32.gmra.mrb[0].mxu0 %v250
        %v1185 = vpop.f32.mrb[0].mxu0
        %v1186 = vadd.f32 %v996, %v1185
        %v1187 = vpop.f32.mrb[0].mxu0
        %1188 = vmatprep.mubr.f32.mxu0 0.0
        %1189 = vmatmul.mubr.f32.gmra.mrb[0].mxu0 %v253
        %v1190 = vpop.f32.mrb[0].mxu0
        %v1191 = vadd.f32 %v1001, %v1190
        %v1192 = vpop.f32.mrb[0].mxu0
        %1193 = vmatprep.mubr.f32.mxu0 0.0
        %1194 = vmatmul.mubr.f32.gmra.mrb[0].mxu0 %v256
        %v1195 = vpop.f32.mrb[0].mxu0
        %v1196 = vadd.f32 %v1006, %v1195
        %v1197 = vpop.f32.mrb[0].mxu0
        %1198 = vmatprep.mubr.f32.mxu0 0.0
        %1199 = vmatmul.mubr.f32.gmra.mrb[0].mxu0 %v259
        %v1200 = vpop.f32.mrb[0].mxu0
        %v1201 = vadd.f32 %v1011, %v1200
        %v1202 = vpop.f32.mrb[0].mxu0
        %1203 = vmatprep.mubr.f32.mxu0 0.0
        %1204 = vmatmul.mubr.f32.gmra.mrb[0].mxu0 %v262
        %v1205 = vpop.f32.mrb[0].mxu0
        %v1206 = vadd.f32 %v1016, %v1205
        %v1207 = vpop.f32.mrb[0].mxu0
        %1208 = vmatprep.mubr.f32.mxu0 0.0
        %1209 = vmatmul.mubr.f32.gmra.mrb[0].mxu0 %v265
        %v1210 = vpop.f32.mrb[0].mxu0
        %v1211 = vadd.f32 %v1021, %v1210
        %v1212 = vpop.f32.mrb[0].mxu0
        %1213 = vmatprep.mubr.f32.mxu0 0.0
        %1214 = vmatmul.mubr.f32.gmra.mrb[0].mxu0 %v268
        %v1215 = vpop.f32.mrb[0].mxu0
        %v1216 = vadd.f32 %v1026, %v1215
        %v1217 = vpop.f32.mrb[0].mxu0
        %1218 = vmatprep.mubr.f32.mxu0 0.0
        %1219 = vmatmul.mubr.f32.gmra.mrb[0].mxu0 %v271
        %v1220 = vpop.f32.mrb[0].mxu0
        %v1221 = vadd.f32 %v1031, %v1220
        %v1222 = vpop.f32.mrb[0].mxu0
        %1223 = vmatprep.mubr.f32.mxu0 0.0
        %1224 = vmatmul.mubr.f32.gmra.mrb[0].mxu0 %v274
        %v1225 = vpop.f32.mrb[0].mxu0
        %v1226 = vadd.f32 %v1036, %v1225
        %v1227 = vpop.f32.mrb[0].mxu0
        %1228 = vmatprep.mubr.f32.mxu0 0.0
        %1229 = vmatmul.mubr.f32.gmra.mrb[0].mxu0 %v277
        %v1230 = vpop.f32.mrb[0].mxu0
        %v1231 = vadd.f32 %v1041, %v1230
        %v1232 = vpop.f32.mrb[0].mxu0
        %1233 = vmatprep.mubr.f32.mxu0 0.0
        %1234 = vmatmul.mubr.f32.gmra.mrb[0].mxu0 %v280
        %v1235 = vpop.f32.mrb[0].mxu0
        %v1236 = vadd.f32 %v1046, %v1235
        %v1237 = vpop.f32.mrb[0].mxu0
        %1238 = vmatprep.mubr.f32.mxu0 0.0
        %1239 = vmatmul.mubr.f32.gmra.mrb[0].mxu0 %v283
        %v1240 = vpop.f32.mrb[0].mxu0
        %v1241 = vadd.f32 %v1051, %v1240
        %v1242 = vpop.f32.mrb[0].mxu0
        %1243 = vmatprep.mubr.f32.mxu0 0.0
        %1244 = vmatmul.mubr.f32.gmra.mrb[0].mxu0 %v286
        %v1245 = vpop.f32.mrb[0].mxu0
        %v1246 = vadd.f32 %v1056, %v1245
        %v1247 = vpop.f32.mrb[0].mxu0
        %1248 = vmatprep.mubr.f32.mxu0 0.0
        %1249 = vmatmul.mubr.f32.gmra.mrb[0].mxu0 %v289
        %v1250 = vpop.f32.mrb[0].mxu0
        %v1251 = vadd.f32 %v1061, %v1250
        %v1252 = vpop.f32.mrb[0].mxu0
        %1253 = vmatprep.mubr.f32.mxu0 0.0
        %1254 = vmatmul.mubr.f32.gmra.mrb[0].mxu0 %v292
        %v1255 = vpop.f32.mrb[0].mxu0
        %v1256 = vadd.f32 %v1066, %v1255
        %v1257 = vpop.f32.mrb[0].mxu0
        %1258 = vmatprep.mubr.f32.mxu0 0.0
        %1259 = vmatmul.mubr.f32.gmra.mrb[0].mxu0 %v295
        %v1260 = vpop.f32.mrb[0].mxu0
        %v1261 = vadd.f32 %v1071, %v1260
        %v1262 = vpop.f32.mrb[0].mxu0
        %1263 = vmatprep.mubr.f32.mxu0 0.0
        %1264 = vmatmul.mubr.f32.gmra.mrb[0].mxu0 %v298
        %v1265 = vpop.f32.mrb[0].mxu0
        %v1266 = vadd.f32 %v1076, %v1265
        %v1267 = vpop.f32.mrb[0].mxu0
        %1268 = vdwg.mxu0
        %v1269 = vmul.f32 %v741, 0.5
        %v1270 = vmul.f32 %v743, 0.5
        %v1271 = vmul.f32 %v1146, 0.5
        %v1272 = vmul.f32 %v747, 0.5
        %v1273 = vmul.f32 %v749, 0.5
        %v1274 = vmul.f32 %v1151, 0.5
        %v1275 = vmul.f32 %v753, 0.5
        %v1276 = vmul.f32 %v755, 0.5
        %v1277 = vmul.f32 %v1156, 0.5
        %v1278 = vmul.f32 %v759, 0.5
        %v1279 = vmul.f32 %v761, 0.5
        %v1280 = vmul.f32 %v1161, 0.5
        %v1281 = vmul.f32 %v765, 0.5
        %v1282 = vmul.f32 %v767, 0.5
        %v1283 = vmul.f32 %v1166, 0.5
        %v1284 = vmul.f32 %v771, 0.5
        %v1285 = vmul.f32 %v773, 0.5
        %v1286 = vmul.f32 %v1171, 0.5
        %v1287 = vmul.f32 %v777, 0.5
        %v1288 = vmul.f32 %v779, 0.5
        %v1289 = vmul.f32 %v1176, 0.5
        %v1290 = vmul.f32 %v783, 0.5
        %v1291 = vmul.f32 %v785, 0.5
        %v1292 = vmul.f32 %v1181, 0.5
        %v1293 = vmul.f32 %v789, 0.5
        %v1294 = vmul.f32 %v791, 0.5
        %v1295 = vmul.f32 %v1186, 0.5
        %v1296 = vmul.f32 %v795, 0.5
        %v1297 = vmul.f32 %v797, 0.5
        %v1298 = vmul.f32 %v1191, 0.5
        %v1299 = vmul.f32 %v801, 0.5
        %v1300 = vmul.f32 %v803, 0.5
        %v1301 = vmul.f32 %v1196, 0.5
        %v1302 = vmul.f32 %v807, 0.5
        %v1303 = vmul.f32 %v809, 0.5
        %v1304 = vmul.f32 %v1201, 0.5
        %v1305 = vmul.f32 %v813, 0.5
        %v1306 = vmul.f32 %v815, 0.5
        %v1307 = vmul.f32 %v1206, 0.5
        %v1308 = vmul.f32 %v819, 0.5
        %v1309 = vmul.f32 %v821, 0.5
        %v1310 = vmul.f32 %v1211, 0.5
        %v1311 = vmul.f32 %v825, 0.5
        %v1312 = vmul.f32 %v827, 0.5
        %v1313 = vmul.f32 %v1216, 0.5
        %v1314 = vmul.f32 %v831, 0.5
        %v1315 = vmul.f32 %v833, 0.5
        %v1316 = vmul.f32 %v1221, 0.5
        %v1317 = vmul.f32 %v837, 0.5
        %v1318 = vmul.f32 %v839, 0.5
        %v1319 = vmul.f32 %v1226, 0.5
        %v1320 = vmul.f32 %v843, 0.5
        %v1321 = vmul.f32 %v845, 0.5
        %v1322 = vmul.f32 %v1231, 0.5
        %v1323 = vmul.f32 %v849, 0.5
        %v1324 = vmul.f32 %v851, 0.5
        %v1325 = vmul.f32 %v1236, 0.5
        %v1326 = vmul.f32 %v855, 0.5
        %v1327 = vmul.f32 %v857, 0.5
        %v1328 = vmul.f32 %v1241, 0.5
        %v1329 = vmul.f32 %v861, 0.5
        %v1330 = vmul.f32 %v863, 0.5
        %v1331 = vmul.f32 %v1246, 0.5
        %v1332 = vmul.f32 %v867, 0.5
        %v1333 = vmul.f32 %v869, 0.5
        %v1334 = vmul.f32 %v1251, 0.5
        %v1335 = vmul.f32 %v873, 0.5
        %v1336 = vmul.f32 %v875, 0.5
        %v1337 = vmul.f32 %v1256, 0.5
        %v1338 = vmul.f32 %v879, 0.5
        %v1339 = vmul.f32 %v881, 0.5
        %v1340 = vmul.f32 %v1261, 0.5
        %v1341 = vmul.f32 %v885, 0.5
        %v1342 = vmul.f32 %v887, 0.5
        %v1343 = vmul.f32 %v1266, 0.5
        %v1344 = vmul.f32 %v741, 0.70710677
        %v1345 = vmul.f32 %v743, 0.70710677
        %v1346 = vmul.f32 %v1146, 0.70710677
        %v1347 = vmul.f32 %v747, 0.70710677
        %v1348 = vmul.f32 %v749, 0.70710677
        %v1349 = vmul.f32 %v1151, 0.70710677
        %v1350 = vmul.f32 %v753, 0.70710677
        %v1351 = vmul.f32 %v755, 0.70710677
        %v1352 = vmul.f32 %v1156, 0.70710677
        %v1353 = vmul.f32 %v759, 0.70710677
        %v1354 = vmul.f32 %v761, 0.70710677
        %v1355 = vmul.f32 %v1161, 0.70710677
        %v1356 = vmul.f32 %v765, 0.70710677
        %v1357 = vmul.f32 %v767, 0.70710677
        %v1358 = vmul.f32 %v1166, 0.70710677
        %v1359 = vmul.f32 %v771, 0.70710677
        %v1360 = vmul.f32 %v773, 0.70710677
        %v1361 = vmul.f32 %v1171, 0.70710677
        %v1362 = vmul.f32 %v777, 0.70710677
        %v1363 = vmul.f32 %v779, 0.70710677
        %v1364 = vmul.f32 %v1176, 0.70710677
        %v1365 = vmul.f32 %v783, 0.70710677
        %v1366 = vmul.f32 %v785, 0.70710677
        %v1367 = vmul.f32 %v1181, 0.70710677
        %v1368 = vmul.f32 %v789, 0.70710677
        %v1369 = vmul.f32 %v791, 0.70710677
        %v1370 = vmul.f32 %v1186, 0.70710677
        %v1371 = vmul.f32 %v795, 0.70710677
        %v1372 = vmul.f32 %v797, 0.70710677
        %v1373 = vmul.f32 %v1191, 0.70710677
        %v1374 = vmul.f32 %v801, 0.70710677
        %v1375 = vmul.f32 %v803, 0.70710677
        %v1376 = vmul.f32 %v1196, 0.70710677
        %v1377 = vmul.f32 %v807, 0.70710677
        %v1378 = vmul.f32 %v809, 0.70710677
        %v1379 = vmul.f32 %v1201, 0.70710677
        %v1380 = vmul.f32 %v813, 0.70710677
        %v1381 = vmul.f32 %v815, 0.70710677
        %v1382 = vmul.f32 %v1206, 0.70710677
        %v1383 = vmul.f32 %v819, 0.70710677
        %v1384 = vmul.f32 %v821, 0.70710677
        %v1385 = vmul.f32 %v1211, 0.70710677
        %v1386 = vmul.f32 %v825, 0.70710677
        %v1387 = vmul.f32 %v827, 0.70710677
        %v1388 = vmul.f32 %v1216, 0.70710677
        %v1389 = vmul.f32 %v831, 0.70710677
        %v1390 = vmul.f32 %v833, 0.70710677
        %v1391 = vmul.f32 %v1221, 0.70710677
        %v1392 = vmul.f32 %v837, 0.70710677
        %v1393 = vmul.f32 %v839, 0.70710677
        %v1394 = vmul.f32 %v1226, 0.70710677
        %v1395 = vmul.f32 %v843, 0.70710677
        %v1396 = vmul.f32 %v845, 0.70710677
        %v1397 = vmul.f32 %v1231, 0.70710677
        %v1398 = vmul.f32 %v849, 0.70710677
        %v1399 = vmul.f32 %v851, 0.70710677
        %v1400 = vmul.f32 %v1236, 0.70710677
        %v1401 = vmul.f32 %v855, 0.70710677
        %v1402 = vmul.f32 %v857, 0.70710677
        %v1403 = vmul.f32 %v1241, 0.70710677
        %v1404 = vmul.f32 %v861, 0.70710677
        %v1405 = vmul.f32 %v863, 0.70710677
        %v1406 = vmul.f32 %v1246, 0.70710677
        %v1407 = vmul.f32 %v867, 0.70710677
        %v1408 = vmul.f32 %v869, 0.70710677
        %v1409 = vmul.f32 %v1251, 0.70710677
        %v1410 = vmul.f32 %v873, 0.70710677
        %v1411 = vmul.f32 %v875, 0.70710677
        %v1412 = vmul.f32 %v1256, 0.70710677
        %v1413 = vmul.f32 %v879, 0.70710677
        %v1414 = vmul.f32 %v881, 0.70710677
        %v1415 = vmul.f32 %v1261, 0.70710677
        %v1416 = vmul.f32 %v885, 0.70710677
        %v1417 = vmul.f32 %v887, 0.70710677
        %v1418 = vmul.f32 %v1266, 0.70710677
        %v1419 = verf.f32.pop %v1344
        %v1420 = verf.f32.pop %v1345
        %v1421 = verf.f32.pop %v1346
        %v1422 = verf.f32.pop %v1347
        %v1423 = verf.f32.pop %v1348
        %v1424 = verf.f32.pop %v1349
        %v1425 = verf.f32.pop %v1350
        %v1426 = verf.f32.pop %v1351
        %v1427 = verf.f32.pop %v1352
        %v1428 = verf.f32.pop %v1353
        %v1429 = verf.f32.pop %v1354
        %v1430 = verf.f32.pop %v1355
        %v1431 = verf.f32.pop %v1356
        %v1432 = verf.f32.pop %v1357
        %v1433 = verf.f32.pop %v1358
        %v1434 = verf.f32.pop %v1359
        %v1435 = verf.f32.pop %v1360
        %v1436 = verf.f32.pop %v1361
        %v1437 = verf.f32.pop %v1362
        %v1438 = verf.f32.pop %v1363
        %v1439 = verf.f32.pop %v1364
        %v1440 = verf.f32.pop %v1365
        %v1441 = verf.f32.pop %v1366
        %v1442 = verf.f32.pop %v1367
        %v1443 = verf.f32.pop %v1368
        %v1444 = verf.f32.pop %v1369
        %v1445 = verf.f32.pop %v1370
        %v1446 = verf.f32.pop %v1371
        %v1447 = verf.f32.pop %v1372
        %v1448 = verf.f32.pop %v1373
        %v1449 = verf.f32.pop %v1374
        %v1450 = verf.f32.pop %v1375
        %v1451 = verf.f32.pop %v1376
        %v1452 = verf.f32.pop %v1377
        %v1453 = verf.f32.pop %v1378
        %v1454 = verf.f32.pop %v1379
        %v1455 = verf.f32.pop %v1380
        %v1456 = verf.f32.pop %v1381
        %v1457 = verf.f32.pop %v1382
        %v1458 = verf.f32.pop %v1383
        %v1459 = verf.f32.pop %v1384
        %v1460 = verf.f32.pop %v1385
        %v1461 = verf.f32.pop %v1386
        %v1462 = verf.f32.pop %v1387
        %v1463 = verf.f32.pop %v1388
        %v1464 = verf.f32.pop %v1389
        %v1465 = verf.f32.pop %v1390
        %v1466 = verf.f32.pop %v1391
        %v1467 = verf.f32.pop %v1392
        %v1468 = verf.f32.pop %v1393
        %v1469 = verf.f32.pop %v1394
        %v1470 = verf.f32.pop %v1395
        %v1471 = verf.f32.pop %v1396
        %v1472 = verf.f32.pop %v1397
        %v1473 = verf.f32.pop %v1398
        %v1474 = verf.f32.pop %v1399
        %v1475 = verf.f32.pop %v1400
        %v1476 = verf.f32.pop %v1401
        %v1477 = verf.f32.pop %v1402
        %v1478 = verf.f32.pop %v1403
        %v1479 = verf.f32.pop %v1404
        %v1480 = verf.f32.pop %v1405
        %v1481 = verf.f32.pop %v1406
        %v1482 = verf.f32.pop %v1407
        %v1483 = verf.f32.pop %v1408
        %v1484 = verf.f32.pop %v1409
        %v1485 = verf.f32.pop %v1410
        %v1486 = verf.f32.pop %v1411
        %v1487 = verf.f32.pop %v1412
        %v1488 = verf.f32.pop %v1413
        %v1489 = verf.f32.pop %v1414
        %v1490 = verf.f32.pop %v1415
        %v1491 = verf.f32.pop %v1416
        %v1492 = verf.f32.pop %v1417
        %v1493 = verf.f32.pop %v1418
        %v1494 = vadd.f32 %v1419, 1.0
        %v1495 = vadd.f32 %v1420, 1.0
        %v1496 = vadd.f32 %v1421, 1.0
        %v1497 = vadd.f32 %v1422, 1.0
        %v1498 = vadd.f32 %v1423, 1.0
        %v1499 = vadd.f32 %v1424, 1.0
        %v1500 = vadd.f32 %v1425, 1.0
        %v1501 = vadd.f32 %v1426, 1.0
        %v1502 = vadd.f32 %v1427, 1.0
        %v1503 = vadd.f32 %v1428, 1.0
        %v1504 = vadd.f32 %v1429, 1.0
        %v1505 = vadd.f32 %v1430, 1.0
        %v1506 = vadd.f32 %v1431, 1.0
        %v1507 = vadd.f32 %v1432, 1.0
        %v1508 = vadd.f32 %v1433, 1.0
        %v1509 = vadd.f32 %v1434, 1.0
        %v1510 = vadd.f32 %v1435, 1.0
        %v1511 = vadd.f32 %v1436, 1.0
        %v1512 = vadd.f32 %v1437, 1.0
        %v1513 = vadd.f32 %v1438, 1.0
        %v1514 = vadd.f32 %v1439, 1.0
        %v1515 = vadd.f32 %v1440, 1.0
        %v1516 = vadd.f32 %v1441, 1.0
        %v1517 = vadd.f32 %v1442, 1.0
        %v1518 = vadd.f32 %v1443, 1.0
        %v1519 = vadd.f32 %v1444, 1.0
        %v1520 = vadd.f32 %v1445, 1.0
        %v1521 = vadd.f32 %v1446, 1.0
        %v1522 = vadd.f32 %v1447, 1.0
        %v1523 = vadd.f32 %v1448, 1.0
        %v1524 = vadd.f32 %v1449, 1.0
        %v1525 = vadd.f32 %v1450, 1.0
        %v1526 = vadd.f32 %v1451, 1.0
        %v1527 = vadd.f32 %v1452, 1.0
        %v1528 = vadd.f32 %v1453, 1.0
        %v1529 = vadd.f32 %v1454, 1.0
        %v1530 = vadd.f32 %v1455, 1.0
        %v1531 = vadd.f32 %v1456, 1.0
        %v1532 = vadd.f32 %v1457, 1.0
        %v1533 = vadd.f32 %v1458, 1.0
        %v1534 = vadd.f32 %v1459, 1.0
        %v1535 = vadd.f32 %v1460, 1.0
        %v1536 = vadd.f32 %v1461, 1.0
        %v1537 = vadd.f32 %v1462, 1.0
        %v1538 = vadd.f32 %v1463, 1.0
        %v1539 = vadd.f32 %v1464, 1.0
        %v1540 = vadd.f32 %v1465, 1.0
        %v1541 = vadd.f32 %v1466, 1.0
        %v1542 = vadd.f32 %v1467, 1.0
        %v1543 = vadd.f32 %v1468, 1.0
        %v1544 = vadd.f32 %v1469, 1.0
        %v1545 = vadd.f32 %v1470, 1.0
        %v1546 = vadd.f32 %v1471, 1.0
        %v1547 = vadd.f32 %v1472, 1.0
        %v1548 = vadd.f32 %v1473, 1.0
        %v1549 = vadd.f32 %v1474, 1.0
        %v1550 = vadd.f32 %v1475, 1.0
        %v1551 = vadd.f32 %v1476, 1.0
        %v1552 = vadd.f32 %v1477, 1.0
        %v1553 = vadd.f32 %v1478, 1.0
        %v1554 = vadd.f32 %v1479, 1.0
        %v1555 = vadd.f32 %v1480, 1.0
        %v1556 = vadd.f32 %v1481, 1.0
        %v1557 = vadd.f32 %v1482, 1.0
        %v1558 = vadd.f32 %v1483, 1.0
        %v1559 = vadd.f32 %v1484, 1.0
        %v1560 = vadd.f32 %v1485, 1.0
        %v1561 = vadd.f32 %v1486, 1.0
        %v1562 = vadd.f32 %v1487, 1.0
        %v1563 = vadd.f32 %v1488, 1.0
        %v1564 = vadd.f32 %v1489, 1.0
        %v1565 = vadd.f32 %v1490, 1.0
        %v1566 = vadd.f32 %v1491, 1.0
        %v1567 = vadd.f32 %v1492, 1.0
        %v1568 = vadd.f32 %v1493, 1.0
        %v1569 = vmul.f32 %v1269, %v1494
        %v1570 = vmul.f32 %v1270, %v1495
        %v1571 = vmul.f32 %v1271, %v1496
        %v1572 = vmul.f32 %v1272, %v1497
        %v1573 = vmul.f32 %v1273, %v1498
        %v1574 = vmul.f32 %v1274, %v1499
        %v1575 = vmul.f32 %v1275, %v1500
        %v1576 = vmul.f32 %v1276, %v1501
        %v1577 = vmul.f32 %v1277, %v1502
        %v1578 = vmul.f32 %v1278, %v1503
        %v1579 = vmul.f32 %v1279, %v1504
        %v1580 = vmul.f32 %v1280, %v1505
        %v1581 = vmul.f32 %v1281, %v1506
        %v1582 = vmul.f32 %v1282, %v1507
        %v1583 = vmul.f32 %v1283, %v1508
        %v1584 = vmul.f32 %v1284, %v1509
        %v1585 = vmul.f32 %v1285, %v1510
        %v1586 = vmul.f32 %v1286, %v1511
        %v1587 = vmul.f32 %v1287, %v1512
        %v1588 = vmul.f32 %v1288, %v1513
        %v1589 = vmul.f32 %v1289, %v1514
        %v1590 = vmul.f32 %v1290, %v1515
        %v1591 = vmul.f32 %v1291, %v1516
        %v1592 = vmul.f32 %v1292, %v1517
        %v1593 = vmul.f32 %v1293, %v1518
        %v1594 = vmul.f32 %v1294, %v1519
        %v1595 = vmul.f32 %v1295, %v1520
        %v1596 = vmul.f32 %v1296, %v1521
        %v1597 = vmul.f32 %v1297, %v1522
        %v1598 = vmul.f32 %v1298, %v1523
        %v1599 = vmul.f32 %v1299, %v1524
        %v1600 = vmul.f32 %v1300, %v1525
        %v1601 = vmul.f32 %v1301, %v1526
        %v1602 = vmul.f32 %v1302, %v1527
        %v1603 = vmul.f32 %v1303, %v1528
        %v1604 = vmul.f32 %v1304, %v1529
        %v1605 = vmul.f32 %v1305, %v1530
        %v1606 = vmul.f32 %v1306, %v1531
        %v1607 = vmul.f32 %v1307, %v1532
        %v1608 = vmul.f32 %v1308, %v1533
        %v1609 = vmul.f32 %v1309, %v1534
        %v1610 = vmul.f32 %v1310, %v1535
        %v1611 = vmul.f32 %v1311, %v1536
        %v1612 = vmul.f32 %v1312, %v1537
        %v1613 = vmul.f32 %v1313, %v1538
        %v1614 = vmul.f32 %v1314, %v1539
        %v1615 = vmul.f32 %v1315, %v1540
        %v1616 = vmul.f32 %v1316, %v1541
        %v1617 = vmul.f32 %v1317, %v1542
        %v1618 = vmul.f32 %v1318, %v1543
        %v1619 = vmul.f32 %v1319, %v1544
        %v1620 = vmul.f32 %v1320, %v1545
        %v1621 = vmul.f32 %v1321, %v1546
        %v1622 = vmul.f32 %v1322, %v1547
        %v1623 = vmul.f32 %v1323, %v1548
        %v1624 = vmul.f32 %v1324, %v1549
        %v1625 = vmul.f32 %v1325, %v1550
        %v1626 = vmul.f32 %v1326, %v1551
        %v1627 = vmul.f32 %v1327, %v1552
        %v1628 = vmul.f32 %v1328, %v1553
        %v1629 = vmul.f32 %v1329, %v1554
        %v1630 = vmul.f32 %v1330, %v1555
        %v1631 = vmul.f32 %v1331, %v1556
        %v1632 = vmul.f32 %v1332, %v1557
        %v1633 = vmul.f32 %v1333, %v1558
        %v1634 = vmul.f32 %v1334, %v1559
        %v1635 = vmul.f32 %v1335, %v1560
        %v1636 = vmul.f32 %v1336, %v1561
        %v1637 = vmul.f32 %v1337, %v1562
        %v1638 = vmul.f32 %v1338, %v1563
        %v1639 = vmul.f32 %v1339, %v1564
        %v1640 = vmul.f32 %v1340, %v1565
        %v1641 = vmul.f32 %v1341, %v1566
        %v1642 = vmul.f32 %v1342, %v1567
        %v1643 = vmul.f32 %v1343, %v1568
        %1644 = vst [vmem:[%s216] sm:$0xff] %v1569
        %1645 = vst [vmem:[%s216 + $0x8] sm:$0xff] %v1570
        %1646 = vst [vmem:[%s216 + $0x10] sm:$0xff] %v1571
        %1647 = vst [vmem:[%s216 + $0x18] sm:$0xff] %v1572
        %1648 = vst [vmem:[%s216 + $0x20] sm:$0xff] %v1573
        %1649 = vst [vmem:[%s216 + $0x28] sm:$0xff] %v1574
        %1650 = vst [vmem:[%s216 + $0x30] sm:$0xff] %v1575
        %1651 = vst [vmem:[%s216 + $0x38] sm:$0xff] %v1576
        %1652 = vst [vmem:[%s216 + $0x40] sm:$0xff] %v1577
        %1653 = vst [vmem:[%s216 + $0x48] sm:$0xff] %v1578
        %1654 = vst [vmem:[%s216 + $0x50] sm:$0xff] %v1579
        %1655 = vst [vmem:[%s216 + $0x58] sm:$0xff] %v1580
        %1656 = vst [vmem:[%s216 + $0x60] sm:$0xff] %v1581
        %1657 = vst [vmem:[%s216 + $0x68] sm:$0xff] %v1582
        %1658 = vst [vmem:[%s216 + $0x70] sm:$0xff] %v1583
        %1659 = vst [vmem:[%s216 + $0x78] sm:$0xff] %v1584
        %1660 = vst [vmem:[%s216 + $0x80] sm:$0xff] %v1585
        %1661 = vst [vmem:[%s216 + $0x88] sm:$0xff] %v1586
        %1662 = vst [vmem:[%s216 + $0x90] sm:$0xff] %v1587
        %1663 = vst [vmem:[%s216 + $0x98] sm:$0xff] %v1588
        %1664 = vst [vmem:[%s216 + $0xa0] sm:$0xff] %v1589
        %1665 = vst [vmem:[%s216 + $0xa8] sm:$0xff] %v1590
        %1666 = vst [vmem:[%s216 + $0xb0] sm:$0xff] %v1591
        %1667 = vst [vmem:[%s216 + $0xb8] sm:$0xff] %v1592
        %1668 = vst [vmem:[%s216 + $0xc0] sm:$0xff] %v1593
        %1669 = vst [vmem:[%s216 + $0xc8] sm:$0xff] %v1594
        %1670 = vst [vmem:[%s216 + $0xd0] sm:$0xff] %v1595
        %1671 = vst [vmem:[%s216 + $0xd8] sm:$0xff] %v1596
        %1672 = vst [vmem:[%s216 + $0xe0] sm:$0xff] %v1597
        %1673 = vst [vmem:[%s216 + $0xe8] sm:$0xff] %v1598
        %1674 = vst [vmem:[%s216 + $0xf0] sm:$0xff] %v1599
        %1675 = vst [vmem:[%s216 + $0xf8] sm:$0xff] %v1600
        %1676 = vst [vmem:[%s216 + $0x100] sm:$0xff] %v1601
        %1677 = vst [vmem:[%s216 + $0x108] sm:$0xff] %v1602
        %1678 = vst [vmem:[%s216 + $0x110] sm:$0xff] %v1603
        %1679 = vst [vmem:[%s216 + $0x118] sm:$0xff] %v1604
        %1680 = vst [vmem:[%s216 + $0x120] sm:$0xff] %v1605
        %1681 = vst [vmem:[%s216 + $0x128] sm:$0xff] %v1606
        %1682 = vst [vmem:[%s216 + $0x130] sm:$0xff] %v1607
        %1683 = vst [vmem:[%s216 + $0x138] sm:$0xff] %v1608
        %1684 = vst [vmem:[%s216 + $0x140] sm:$0xff] %v1609
        %1685 = vst [vmem:[%s216 + $0x148] sm:$0xff] %v1610
        %1686 = vst [vmem:[%s216 + $0x150] sm:$0xff] %v1611
        %1687 = vst [vmem:[%s216 + $0x158] sm:$0xff] %v1612
        %1688 = vst [vmem:[%s216 + $0x160] sm:$0xff] %v1613
        %1689 = vst [vmem:[%s216 + $0x168] sm:$0xff] %v1614
        %1690 = vst [vmem:[%s216 + $0x170] sm:$0xff] %v1615
        %1691 = vst [vmem:[%s216 + $0x178] sm:$0xff] %v1616
        %1692 = vst [vmem:[%s216 + $0x180] sm:$0xff] %v1617
        %1693 = vst [vmem:[%s216 + $0x188] sm:$0xff] %v1618
        %1694 = vst [vmem:[%s216 + $0x190] sm:$0xff] %v1619
        %1695 = vst [vmem:[%s216 + $0x198] sm:$0xff] %v1620
        %1696 = vst [vmem:[%s216 + $0x1a0] sm:$0xff] %v1621
        %1697 = vst [vmem:[%s216 + $0x1a8] sm:$0xff] %v1622
        %1698 = vst [vmem:[%s216 + $0x1b0] sm:$0xff] %v1623
        %1699 = vst [vmem:[%s216 + $0x1b8] sm:$0xff] %v1624
        %1700 = vst [vmem:[%s216 + $0x1c0] sm:$0xff] %v1625
        %1701 = vst [vmem:[%s216 + $0x1c8] sm:$0xff] %v1626
        %1702 = vst [vmem:[%s216 + $0x1d0] sm:$0xff] %v1627
        %1703 = vst [vmem:[%s216 + $0x1d8] sm:$0xff] %v1628
        %1704 = vst [vmem:[%s216 + $0x1e0] sm:$0xff] %v1629
        %1705 = vst [vmem:[%s216 + $0x1e8] sm:$0xff] %v1630
        %1706 = vst [vmem:[%s216 + $0x1f0] sm:$0xff] %v1631
        %1707 = vst [vmem:[%s216 + $0x1f8] sm:$0xff] %v1632
        %1708 = vst [vmem:[%s216 + $0x200] sm:$0xff] %v1633
        %1709 = vst [vmem:[%s216 + $0x208] sm:$0xff] %v1634
        %1710 = vst [vmem:[%s216 + $0x210] sm:$0xff] %v1635
        %1711 = vst [vmem:[%s216 + $0x218] sm:$0xff] %v1636
        %1712 = vst [vmem:[%s216 + $0x220] sm:$0xff] %v1637
        %1713 = vst [vmem:[%s216 + $0x228] sm:$0xff] %v1638
        %1714 = vst [vmem:[%s216 + $0x230] sm:$0xff] %v1639
        %1715 = vst [vmem:[%s216 + $0x238] sm:$0xff] %v1640
        %1716 = vst [vmem:[%s216 + $0x240] sm:$0xf] %v1641
        %1717 = vst [vmem:[%s216 + $0x248] sm:$0xf] %v1642
        %1718 = vst [vmem:[%s216 + $0x250] sm:$0xf] %v1643
        %s1719 = sand.u32 %s97, 1
        %s1720 = scalar_lea.sflag [#allocation4], %s1719
        %s1721 = sand.u32 %s97, 1
        %s1722 = smul.addr %s1721, 600
        %s1723 = scalar_lea.vmem [#allocation8], %s1722
        // Predicated region
        $region45: #{tpu_custom_call.1} parent=31 // pred_check
          %p1724 = pneg %p107
        $region46: #{tpu_custom_call.1} parent=31 // pred_check_branch
          %1726 = sbr.rel (%p1724) target = $region48
        $region47: #{tpu_custom_call.1} parent=31 // pred_region
          %s1727 = smul.u32 3, %s21
          %s1729 = ssub.s32 9600, 9600
          %1730 = vsyncadd %s1720, %s1729
          %s1731 = smul.addr %s1727, 128
          %s1732 = scalar_lea.hbm %s3, %s1731
          %s1733 = sshll.u32 %s1723, 4
          %s1734 = int_to_ptr.vmem [resolvable:$true] %s1733
          %1739 = dma.vmem_to_hbm [thread:$0]  %s1734, 9600, %s1732, %s1720, 384, 1536, 24
        $region48: #{tpu_custom_call.1} parent=31 // pred_fallthru
          _
      $region32: #{tpu_custom_call.1} parent=5 // pred_fallthru
        _
      %p1740 = scmp.le.s32.totalorder 2, %s16
      // Predicated region
      $region49: #{tpu_custom_call.1} parent=5 // pred_check
        %p1741 = pneg %p1740
      $region50: #{tpu_custom_call.1} parent=5 // pred_check_branch
        %1743 = sbr.rel (%p1741) target = $region52
      $region51: #{tpu_custom_call.1} parent=5 // pred_region
        %s1744 = ssub.s32 %s16, 2
        // Predicated region
        $region53: #{tpu_custom_call.1} parent=51 // pred_check
          %p1745 = pneg %p113
        $region54: #{tpu_custom_call.1} parent=51 // pred_check_branch
          %1747 = sbr.rel (%p1745) target = $region56
        $region55: #{tpu_custom_call.1} parent=51 // pred_region
          %s1748 = sand.u32 %s98, 1
          %s1749 = scalar_lea.sflag [#allocation4], %s1748
          %s1750 = sand.u32 %s98, 1
          %s1751 = smul.addr %s1750, 600
          %s1752 = scalar_lea.vmem [#allocation8], %s1751
          %1753 = dma.done %s1749, 9600
        $region56: #{tpu_custom_call.1} parent=51 // pred_fallthru
          _
      $region52: #{tpu_custom_call.1} parent=5 // pred_fallthru
        _
    $region6: #{tpu_custom_call.1} parent=1 // loop_footer
      %s20 = sadd.s32 1, %s16
    $region7: #{tpu_custom_call.1} parent=1 // loop_footer_branch
      %15 = sbr.rel target = $region3
    $region8: #{tpu_custom_call.1} parent=1 // loop_exit
      _
    %1754 = vsyncpa [#allocation3], 1
    %s1755 = scalar_lea.sflag [#allocation3], 1
    %1756 = vsyncpa %s1755, 1
    %1757 = vsyncpa [#allocation6], 1
    %s1758 = scalar_lea.sflag [#allocation6], 1
    %1759 = vsyncpa %s1758, 1
    %1760 = vsyncpa [#allocation4], 1
    %s1761 = scalar_lea.sflag [#allocation4], 1
    %1762 = vsyncpa %s1761, 1

</llo_original>
